<compile_context>
chip_gen: v7x
topology: tpu7x:2x2x1
jax: 0.10.0
libtpu: 0.0.40
codegen_flags: <defaults>
</compile_context>

<pallas_src>
import jax
import jax.numpy as jnp
from jax import lax
from jax.experimental import pallas as pl
from jax.experimental.pallas import tpu as pltpu


def _lstm_classifier_kernel(
    x_ref,          # (T*B, I)   time-major rows: row index = t*B + b
    wih0_ref,       # (I, 4H)    gate columns packed [i, f, o, g]
    whh0_ref,       # (H, 4H)
    b0_ref,         # (1, 4H)    (= b_ih0 + b_hh0)
    wih1_ref,       # (H, 4H)
    whh1_ref,       # (H, 4H)
    b1_ref,         # (1, 4H)    (= b_ih1 + b_hh1)
    bn_scale_ref,   # (1, H)     gamma / sqrt(running_var + eps)
    bn_bias_ref,    # (1, H)     beta - running_mean * scale
    fc1_w_ref,      # (H, H//2)
    fc1_b_ref,      # (1, H//2)
    fc2_w_ref,      # (1, H//2)  row vector of Linear(H//2, 1) weight
    fc2_b_ref,      # (1, 1)
    out_ref,        # (B, 1)
    gx_scr,         # VMEM (T*B, 4H) layer-0 input-gate pre-projections
):
    B = out_ref.shape[0]
    TB = x_ref.shape[0]
    T = TB // B
    H = whh0_ref.shape[0]

    # ---- One fat matmul: layer-0 input projection (+bias) for every timestep
    gx_scr[...] = (
        jnp.dot(x_ref[...], wih0_ref[...], preferred_element_type=jnp.float32)
        + b0_ref[...]
    )

    # Hoist loop-invariant weights / biases out of the recurrence.
    whh0 = whh0_ref[...]
    wih1 = wih1_ref[...]
    whh1 = whh1_ref[...]
    b1b = jnp.broadcast_to(b1_ref[...], (B, 4 * H))  # hoisted: not re-broadcast per step

    def gates_to_state(gates, c_prev):
        # Gates packed [i, f, o, g]: one sigmoid pass + one tanh pass.
        ifo = jax.nn.sigmoid(gates[:, : 3 * H])
        g = jnp.tanh(gates[:, 3 * H:])
        i = ifo[:, :H]
        f = ifo[:, H:2 * H]
        o = ifo[:, 2 * H:]
        c_new = f * c_prev + i * g
        h_new = o * jnp.tanh(c_new)
        return h_new, c_new

    def read_gx(t):
        # Contiguous, sublane-aligned (B, 4H) slice (time-major layout).
        start = pl.multiple_of(t * B, B)
        return gx_scr[pl.ds(start, B), :]

    zeros = jnp.zeros((B, H), jnp.float32)

    # ---- Prologue: layer-0 at t=0 (h0_{-1}=0, recurrent matmul elided) -----
    h0, c0 = gates_to_state(read_gx(0), zeros)
    h1, c1 = zeros, zeros  # layer-1 state at t = -1

    # ---- Skewed recurrence: iteration k does layer-0 @ t=k and layer-1 @ t=k-1
    def step(k, carry):
        h0_prev, c0_prev, h1_prev, c1_prev = carry
        # Layer 0 at t=k (needs only h0_{k-1}).
        gates0 = read_gx(k) + jnp.dot(h0_prev, whh0,
                                      preferred_element_type=jnp.float32)
        # Layer 1 at t=k-1 (needs h0_{k-1} and h1_{k-2}); split matmuls — no
        # lane concat, drains can overlap with layer-0's matmul.
        # (Inter-layer dropout p=0.3 is identity in eval mode.)
        gates1 = (
            jnp.dot(h0_prev, wih1, preferred_element_type=jnp.float32)
            + jnp.dot(h1_prev, whh1, preferred_element_type=jnp.float32)
            + b1b
        )
        h0_new, c0_new = gates_to_state(gates0, c0_prev)
        h1_new, c1_new = gates_to_state(gates1, c1_prev)
        return (h0_new, c0_new, h1_new, c1_new)

    unroll = max(1, min(T - 1, 16))
    h0, c0, h1, c1 = lax.fori_loop(1, T, step, (h0, c0, h1, c1), unroll=unroll)

    # ---- Epilogue: layer-1 at t=T-1 -----------------------------------------
    gates1 = (
        jnp.dot(h0, wih1, preferred_element_type=jnp.float32)
        + jnp.dot(h1, whh1, preferred_element_type=jnp.float32)
        + b1b
    )
    h1, _ = gates_to_state(gates1, c1)

    # ---- Head: BN (eval, folded affine) -> Linear -> ReLU -> Linear -> sigmoid
    y = h1 * bn_scale_ref[...] + bn_bias_ref[...]
    # Dropout(0.5) is identity in eval mode.
    z = jnp.dot(y, fc1_w_ref[...], preferred_element_type=jnp.float32) + fc1_b_ref[...]
    z = jnp.maximum(z, 0.0)
    # 1-wide output: VPU multiply + lane reduction instead of an N=1 MXU matmul.
    logits = jnp.sum(z * fc2_w_ref[...], axis=-1, keepdims=True) + fc2_b_ref[...]
    out_ref[...] = jax.nn.sigmoid(logits)


def lstm_binary_classifier(x, params):
    """x: (B, T, I) float32 (batch_first). Returns (B, 1) float32 probabilities."""
    B, T, I = x.shape
    H = params["whh0"].shape[0]

    # Time-major layout (row index = t*B + b): the per-step in-kernel gate read
    # becomes one aligned contiguous (B, 4H) slice instead of a stride-T
    # sublane gather. One-time transpose amortizes over T steps.
    x_tm = jnp.transpose(x, (1, 0, 2)).reshape(T * B, I)

    weight_args = (
        params["wih0"], params["whh0"], params["b0"],
        params["wih1"], params["whh1"], params["b1"],
        params["bn_scale"], params["bn_bias"],
        params["fc1_w"], params["fc1_b"],
        params["fc2_w_row"], params["fc2_b"],
    )

    vmem_spec = pl.BlockSpec(memory_space=pltpu.MemorySpace.VMEM)

    return pl.pallas_call(
        _lstm_classifier_kernel,
        out_shape=jax.ShapeDtypeStruct((B, 1), jnp.float32),
        in_specs=[vmem_spec] * (1 + len(weight_args)),
        out_specs=vmem_spec,
        scratch_shapes=[pltpu.VMEM((T * B, 4 * H), jnp.float32)],
        compiler_params=pltpu.CompilerParams(vmem_limit_bytes=32 * 1024 * 1024),
    )(x_tm, *weight_args)


def _repack_gates(w4h, H):
    """Permute last-dim gate blocks from PyTorch order [i,f,g,o] to [i,f,o,g]."""
    i = w4h[..., :H]
    f = w4h[..., H:2 * H]
    g = w4h[..., 2 * H:3 * H]
    o = w4h[..., 3 * H:]
    return jnp.concatenate([i, f, o, g], axis=-1)


def make_params(key, input_size, hidden_size):
    """Deterministic synthetic parameters matching the PyTorch module's shapes."""
    I, H = input_size, hidden_size
    H2 = H // 2
    ks = jax.random.split(key, 16)
    k_bias = 1.0 / jnp.sqrt(H)

    def xavier_normal(k, shape):  # (fan_out, fan_in)
        std = jnp.sqrt(2.0 / (shape[0] + shape[1]))
        return std * jax.random.normal(k, shape, jnp.float32)

    def orthogonal(k, shape):  # semi-orthogonal like torch.nn.init.orthogonal_
        a = jax.random.normal(k, shape, jnp.float32)
        q, _ = jnp.linalg.qr(a)
        return q[:, : shape[1]] if shape[0] >= shape[1] else q

    # nn.LSTM stores weight_ih_l{k}: (4H, in), weight_hh_l{k}: (4H, H)
    w_ih0 = xavier_normal(ks[0], (4 * H, I))
    w_hh0 = orthogonal(ks[1], (4 * H, H))
    b_ih0 = jax.random.uniform(ks[2], (4 * H,), jnp.float32, -k_bias, k_bias)
    b_hh0 = jax.random.uniform(ks[3], (4 * H,), jnp.float32, -k_bias, k_bias)

    w_ih1 = xavier_normal(ks[4], (4 * H, H))
    w_hh1 = orthogonal(ks[5], (4 * H, H))
    b_ih1 = jax.random.uniform(ks[6], (4 * H,), jnp.float32, -k_bias, k_bias)
    b_hh1 = jax.random.uniform(ks[7], (4 * H,), jnp.float32, -k_bias, k_bias)

    # BatchNorm1d(H) eval-mode stats
    gamma = 1.0 + 0.1 * jax.random.normal(ks[8], (H,), jnp.float32)
    beta = 0.1 * jax.random.normal(ks[9], (H,), jnp.float32)
    running_mean = 0.05 * jax.random.normal(ks[10], (H,), jnp.float32)
    running_var = 1.0 + 0.1 * jax.random.uniform(ks[11], (H,), jnp.float32)
    eps = 1e-5
    bn_scale = gamma / jnp.sqrt(running_var + eps)
    bn_bias = beta - running_mean * bn_scale

    # fc: Linear(H, H//2) -> ReLU -> Linear(H//2, 1)
    fc1_w = (1.0 / jnp.sqrt(H)) * jax.random.normal(ks[12], (H2, H), jnp.float32)
    fc1_b = (1.0 / jnp.sqrt(H)) * jax.random.normal(ks[13], (H2,), jnp.float32)
    fc2_w = (1.0 / jnp.sqrt(H2)) * jax.random.normal(ks[14], (1, H2), jnp.float32)
    fc2_b = (1.0 / jnp.sqrt(H2)) * jax.random.normal(ks[15], (1,), jnp.float32)

    # Kernel-friendly layouts: matmuls are x @ W (transposed), gate columns
    # re-packed to [i, f, o, g] so one sigmoid + one tanh cover all gates.
    return {
        "wih0": _repack_gates(w_ih0.T, H),                    # (I, 4H)
        "whh0": _repack_gates(w_hh0.T, H),                    # (H, 4H)
        "b0": _repack_gates((b_ih0 + b_hh0)[None, :], H),     # (1, 4H)
        "wih1": _repack_gates(w_ih1.T, H),                    # (H, 4H)
        "whh1": _repack_gates(w_hh1.T, H),                    # (H, 4H)
        "b1": _repack_gates((b_ih1 + b_hh1)[None, :], H),     # (1, 4H)
        "bn_scale": bn_scale[None, :],                        # (1, H)
        "bn_bias": bn_bias[None, :],                          # (1, H)
        "fc1_w": fc1_w.T,                                     # (H, H2)
        "fc1_b": fc1_b[None, :],                              # (1, H2)
        "fc2_w_row": fc2_w,                                   # (1, H2)
        "fc2_b": fc2_b[None, :],                              # (1, 1)
    }


def reference_forward(x, params):
    """Pure-JAX reference (same eval-mode semantics, [i,f,o,g] packing)."""
    B, T, I = x.shape
    H = params["whh0"].shape[0]
    h0 = jnp.zeros((B, H), jnp.float32)
    c0 = jnp.zeros((B, H), jnp.float32)
    h1 = jnp.zeros((B, H), jnp.float32)
    c1 = jnp.zeros((B, H), jnp.float32)

    def gate_step(gates, c_prev):
        i = jax.nn.sigmoid(gates[:, :H])
        f = jax.nn.sigmoid(gates[:, H:2 * H])
        o = jax.nn.sigmoid(gates[:, 2 * H:3 * H])
        g = jnp.tanh(gates[:, 3 * H:])
        c = f * c_prev + i * g
        return o * jnp.tanh(c), c

    for t in range(T):
        x_t = x[:, t, :]
        g0 = x_t @ params["wih0"] + h0 @ params["whh0"] + params["b0"]
        h0, c0 = gate_step(g0, c0)
        g1 = h0 @ params["wih1"] + h1 @ params["whh1"] + params["b1"]
        h1, c1 = gate_step(g1, c1)

    y = h1 * params["bn_scale"] + params["bn_bias"]
    z = jnp.maximum(y @ params["fc1_w"] + params["fc1_b"], 0.0)
    logits = jnp.sum(z * params["fc2_w_row"], axis=-1, keepdims=True) + params["fc2_b"]
    return jax.nn.sigmoid(logits)


if __name__ == "__main__":
    B, T, I, H = 8, 8, 16, 32  # batch, seq_len, input_size, hidden_size
    key = jax.random.PRNGKey(0)
    k_x, k_p = jax.random.split(key)

    x = jax.random.normal(k_x, (B, T, I), jnp.float32)
    params = make_params(k_p, I, H)

    fwd = jax.jit(lstm_binary_classifier)
    out = jax.block_until_ready(fwd(x, params))
    ref = reference_forward(x, params)

    assert out.shape == (B, 1)
    assert bool(jnp.all(jnp.isfinite(out)))
    assert jnp.allclose(out, ref, atol=1e-5, rtol=1e-5)
    print("KERNEL_OK")
</pallas_src>

<mosaic_0001>
module attributes {stable_mosaic.version = 11 : i64} {
  func.func @_lstm_classifier_kernel(%arg0: memref<64x16xf32, #tpu.memory_space<vmem>>, %arg1: memref<16x128xf32, #tpu.memory_space<vmem>>, %arg2: memref<32x128xf32, #tpu.memory_space<vmem>>, %arg3: memref<1x128xf32, #tpu.memory_space<vmem>>, %arg4: memref<32x128xf32, #tpu.memory_space<vmem>>, %arg5: memref<32x128xf32, #tpu.memory_space<vmem>>, %arg6: memref<1x128xf32, #tpu.memory_space<vmem>>, %arg7: memref<1x32xf32, #tpu.memory_space<vmem>>, %arg8: memref<1x32xf32, #tpu.memory_space<vmem>>, %arg9: memref<32x16xf32, #tpu.memory_space<vmem>>, %arg10: memref<1x16xf32, #tpu.memory_space<vmem>>, %arg11: memref<1x16xf32, #tpu.memory_space<vmem>>, %arg12: memref<1x1xf32, #tpu.memory_space<vmem>>, %arg13: memref<8x1xf32, #tpu.memory_space<vmem>>, %arg14: memref<64x128xf32, #tpu.memory_space<vmem>>) attributes {dimension_semantics = [], scalar_prefetch = 0 : i64, scratch_operands = 1 : i64, tpu.core_type = #tpu.core_type<tc>} {
    %c0 = arith.constant 0 : index
    %c0_0 = arith.constant 0 : index
    %0 = vector.load %arg0[%c0, %c0_0] : memref<64x16xf32, #tpu.memory_space<vmem>>, vector<64x16xf32>
    %c0_1 = arith.constant 0 : index
    %c0_2 = arith.constant 0 : index
    %1 = vector.load %arg1[%c0_1, %c0_2] : memref<16x128xf32, #tpu.memory_space<vmem>>, vector<16x128xf32>
    %cst = arith.constant dense<0.000000e+00> : vector<64x128xf32>
    %2 = tpu.matmul %0, %1, %cst {dimension_numbers = #tpu.dot_dimension_numbers<[1], [0], [0], [1], [0, 0, 1, 1], [], []>} : vector<64x16xf32>, vector<16x128xf32>, vector<64x128xf32> -> vector<64x128xf32>
    %c0_3 = arith.constant 0 : index
    %c0_4 = arith.constant 0 : index
    %3 = vector.load %arg3[%c0_3, %c0_4] : memref<1x128xf32, #tpu.memory_space<vmem>>, vector<1x128xf32>
    %4 = vector.broadcast %3 : vector<1x128xf32> to vector<64x128xf32>
    %5 = arith.addf %2, %4 : vector<64x128xf32>
    %c0_5 = arith.constant 0 : index
    %c0_6 = arith.constant 0 : index
    %6 = vector.load %arg14[%c0_5, %c0_6] : memref<64x128xf32, #tpu.memory_space<vmem>>, vector<64x128xf32>
    tpu.vector_store %arg14[%c0_5, %c0_6], %5 {strides = array<i32>} : memref<64x128xf32, #tpu.memory_space<vmem>>, vector<64x128xf32>,
    %c0_7 = arith.constant 0 : index
    %c0_8 = arith.constant 0 : index
    %7 = vector.load %arg2[%c0_7, %c0_8] : memref<32x128xf32, #tpu.memory_space<vmem>>, vector<32x128xf32>
    %c0_9 = arith.constant 0 : index
    %c0_10 = arith.constant 0 : index
    %8 = vector.load %arg4[%c0_9, %c0_10] : memref<32x128xf32, #tpu.memory_space<vmem>>, vector<32x128xf32>
    %c0_11 = arith.constant 0 : index
    %c0_12 = arith.constant 0 : index
    %9 = vector.load %arg5[%c0_11, %c0_12] : memref<32x128xf32, #tpu.memory_space<vmem>>, vector<32x128xf32>
    %c0_13 = arith.constant 0 : index
    %c0_14 = arith.constant 0 : index
    %10 = vector.load %arg6[%c0_13, %c0_14] : memref<1x128xf32, #tpu.memory_space<vmem>>, vector<1x128xf32>
    %11 = vector.shape_cast %10 : vector<1x128xf32> to vector<1x128xf32>
    %12 = vector.broadcast %11 : vector<1x128xf32> to vector<8x128xf32>
    %cst_15 = arith.constant 0.000000e+00 : f32
    %13 = vector.broadcast %cst_15 : f32 to vector<8x32xf32>
    %c0_i32 = arith.constant 0 : i32
    %14 = tpu.assume_multiple %c0_i32, 8 : i32
    %15 = arith.index_cast %14 : i32 to index
    %c0_16 = arith.constant 0 : index
    %16 = vector.load %arg14[%15, %c0_16] : memref<64x128xf32, #tpu.memory_space<vmem>>, vector<8x128xf32>
    %17 = vector.extract_strided_slice %16 {offsets = [0, 0], sizes = [8, 96], strides = [1, 1]} : vector<8x128xf32> to vector<8x96xf32>
    %18 = arith.negf %17 : vector<8x96xf32>
    %19 = math.exp %18 : vector<8x96xf32>
    %cst_17 = arith.constant 1.000000e+00 : f32
    %20 = vector.broadcast %cst_17 : f32 to vector<8x96xf32>
    %21 = arith.addf %20, %19 : vector<8x96xf32>
    %22 = arith.divf %20, %21 : vector<8x96xf32>
    %23 = vector.extract_strided_slice %16 {offsets = [0, 96], sizes = [8, 32], strides = [1, 1]} : vector<8x128xf32> to vector<8x32xf32>
    %24 = math.tanh %23 : vector<8x32xf32>
    %25 = vector.extract_strided_slice %22 {offsets = [0, 0], sizes = [8, 32], strides = [1, 1]} : vector<8x96xf32> to vector<8x32xf32>
    %26 = vector.extract_strided_slice %22 {offsets = [0, 32], sizes = [8, 32], strides = [1, 1]} : vector<8x96xf32> to vector<8x32xf32>
    %27 = vector.extract_strided_slice %22 {offsets = [0, 64], sizes = [8, 32], strides = [1, 1]} : vector<8x96xf32> to vector<8x32xf32>
    %28 = arith.mulf %26, %13 : vector<8x32xf32>
    %29 = arith.mulf %25, %24 : vector<8x32xf32>
    %30 = arith.addf %28, %29 : vector<8x32xf32>
    %31 = math.tanh %30 : vector<8x32xf32>
    %32 = arith.mulf %27, %31 : vector<8x32xf32>
    %c1_i32 = arith.constant 1 : i32
    %c8_i32 = arith.constant 8 : i32
    %33 = arith.muli %c1_i32, %c8_i32 : i32
    %34 = tpu.assume_multiple %33, 8 : i32
    %35 = arith.index_cast %34 : i32 to index
    %c0_18 = arith.constant 0 : index
    %36 = vector.load %arg14[%35, %c0_18] : memref<64x128xf32, #tpu.memory_space<vmem>>, vector<8x128xf32>
    %cst_19 = arith.constant dense<0.000000e+00> : vector<8x128xf32>
    %37 = tpu.matmul %32, %7, %cst_19 {dimension_numbers = #tpu.dot_dimension_numbers<[1], [0], [0], [1], [0, 0, 1, 1], [], []>} : vector<8x32xf32>, vector<32x128xf32>, vector<8x128xf32> -> vector<8x128xf32>
    %38 = arith.addf %36, %37 : vector<8x128xf32>
    %cst_20 = arith.constant dense<0.000000e+00> : vector<8x128xf32>
    %39 = tpu.matmul %32, %8, %cst_20 {dimension_numbers = #tpu.dot_dimension_numbers<[1], [0], [0], [1], [0, 0, 1, 1], [], []>} : vector<8x32xf32>, vector<32x128xf32>, vector<8x128xf32> -> vector<8x128xf32>
    %cst_21 = arith.constant dense<0.000000e+00> : vector<8x128xf32>
    %40 = tpu.matmul %13, %9, %cst_21 {dimension_numbers = #tpu.dot_dimension_numbers<[1], [0], [0], [1], [0, 0, 1, 1], [], []>} : vector<8x32xf32>, vector<32x128xf32>, vector<8x128xf32> -> vector<8x128xf32>
    %41 = arith.addf %39, %40 : vector<8x128xf32>
    %42 = arith.addf %41, %12 : vector<8x128xf32>
    %43 = vector.extract_strided_slice %38 {offsets = [0, 0], sizes = [8, 96], strides = [1, 1]} : vector<8x128xf32> to vector<8x96xf32>
    %44 = arith.negf %43 : vector<8x96xf32>
    %45 = math.exp %44 : vector<8x96xf32>
    %cst_22 = arith.constant 1.000000e+00 : f32
    %46 = vector.broadcast %cst_22 : f32 to vector<8x96xf32>
    %47 = arith.addf %46, %45 : vector<8x96xf32>
    %48 = arith.divf %46, %47 : vector<8x96xf32>
    %49 = vector.extract_strided_slice %38 {offsets = [0, 96], sizes = [8, 32], strides = [1, 1]} : vector<8x128xf32> to vector<8x32xf32>
    %50 = math.tanh %49 : vector<8x32xf32>
    %51 = vector.extract_strided_slice %48 {offsets = [0, 0], sizes = [8, 32], strides = [1, 1]} : vector<8x96xf32> to vector<8x32xf32>
    %52 = vector.extract_strided_slice %48 {offsets = [0, 32], sizes = [8, 32], strides = [1, 1]} : vector<8x96xf32> to vector<8x32xf32>
    %53 = vector.extract_strided_slice %48 {offsets = [0, 64], sizes = [8, 32], strides = [1, 1]} : vector<8x96xf32> to vector<8x32xf32>
    %54 = arith.mulf %52, %30 : vector<8x32xf32>
    %55 = arith.mulf %51, %50 : vector<8x32xf32>
    %56 = arith.addf %54, %55 : vector<8x32xf32>
    %57 = math.tanh %56 : vector<8x32xf32>
    %58 = arith.mulf %53, %57 : vector<8x32xf32>
    %59 = vector.extract_strided_slice %42 {offsets = [0, 0], sizes = [8, 96], strides = [1, 1]} : vector<8x128xf32> to vector<8x96xf32>
    %60 = arith.negf %59 : vector<8x96xf32>
    %61 = math.exp %60 : vector<8x96xf32>
    %cst_23 = arith.constant 1.000000e+00 : f32
    %62 = vector.broadcast %cst_23 : f32 to vector<8x96xf32>
    %63 = arith.addf %62, %61 : vector<8x96xf32>
    %64 = arith.divf %62, %63 : vector<8x96xf32>
    %65 = vector.extract_strided_slice %42 {offsets = [0, 96], sizes = [8, 32], strides = [1, 1]} : vector<8x128xf32> to vector<8x32xf32>
    %66 = math.tanh %65 : vector<8x32xf32>
    %67 = vector.extract_strided_slice %64 {offsets = [0, 0], sizes = [8, 32], strides = [1, 1]} : vector<8x96xf32> to vector<8x32xf32>
    %68 = vector.extract_strided_slice %64 {offsets = [0, 32], sizes = [8, 32], strides = [1, 1]} : vector<8x96xf32> to vector<8x32xf32>
    %69 = vector.extract_strided_slice %64 {offsets = [0, 64], sizes = [8, 32], strides = [1, 1]} : vector<8x96xf32> to vector<8x32xf32>
    %70 = arith.mulf %68, %13 : vector<8x32xf32>
    %71 = arith.mulf %67, %66 : vector<8x32xf32>
    %72 = arith.addf %70, %71 : vector<8x32xf32>
    %73 = math.tanh %72 : vector<8x32xf32>
    %74 = arith.mulf %69, %73 : vector<8x32xf32>
    %c2_i32 = arith.constant 2 : i32
    %c8_i32_24 = arith.constant 8 : i32
    %75 = arith.muli %c2_i32, %c8_i32_24 : i32
    %76 = tpu.assume_multiple %75, 8 : i32
    %77 = arith.index_cast %76 : i32 to index
    %c0_25 = arith.constant 0 : index
    %78 = vector.load %arg14[%77, %c0_25] : memref<64x128xf32, #tpu.memory_space<vmem>>, vector<8x128xf32>
    %cst_26 = arith.constant dense<0.000000e+00> : vector<8x128xf32>
    %79 = tpu.matmul %58, %7, %cst_26 {dimension_numbers = #tpu.dot_dimension_numbers<[1], [0], [0], [1], [0, 0, 1, 1], [], []>} : vector<8x32xf32>, vector<32x128xf32>, vector<8x128xf32> -> vector<8x128xf32>
    %80 = arith.addf %78, %79 : vector<8x128xf32>
    %cst_27 = arith.constant dense<0.000000e+00> : vector<8x128xf32>
    %81 = tpu.matmul %58, %8, %cst_27 {dimension_numbers = #tpu.dot_dimension_numbers<[1], [0], [0], [1], [0, 0, 1, 1], [], []>} : vector<8x32xf32>, vector<32x128xf32>, vector<8x128xf32> -> vector<8x128xf32>
    %cst_28 = arith.constant dense<0.000000e+00> : vector<8x128xf32>
    %82 = tpu.matmul %74, %9, %cst_28 {dimension_numbers = #tpu.dot_dimension_numbers<[1], [0], [0], [1], [0, 0, 1, 1], [], []>} : vector<8x32xf32>, vector<32x128xf32>, vector<8x128xf32> -> vector<8x128xf32>
    %83 = arith.addf %81, %82 : vector<8x128xf32>
    %84 = arith.addf %83, %12 : vector<8x128xf32>
    %85 = vector.extract_strided_slice %80 {offsets = [0, 0], sizes = [8, 96], strides = [1, 1]} : vector<8x128xf32> to vector<8x96xf32>
    %86 = arith.negf %85 : vector<8x96xf32>
    %87 = math.exp %86 : vector<8x96xf32>
    %cst_29 = arith.constant 1.000000e+00 : f32
    %88 = vector.broadcast %cst_29 : f32 to vector<8x96xf32>
    %89 = arith.addf %88, %87 : vector<8x96xf32>
    %90 = arith.divf %88, %89 : vector<8x96xf32>
    %91 = vector.extract_strided_slice %80 {offsets = [0, 96], sizes = [8, 32], strides = [1, 1]} : vector<8x128xf32> to vector<8x32xf32>
    %92 = math.tanh %91 : vector<8x32xf32>
    %93 = vector.extract_strided_slice %90 {offsets = [0, 0], sizes = [8, 32], strides = [1, 1]} : vector<8x96xf32> to vector<8x32xf32>
    %94 = vector.extract_strided_slice %90 {offsets = [0, 32], sizes = [8, 32], strides = [1, 1]} : vector<8x96xf32> to vector<8x32xf32>
    %95 = vector.extract_strided_slice %90 {offsets = [0, 64], sizes = [8, 32], strides = [1, 1]} : vector<8x96xf32> to vector<8x32xf32>
    %96 = arith.mulf %94, %56 : vector<8x32xf32>
    %97 = arith.mulf %93, %92 : vector<8x32xf32>
    %98 = arith.addf %96, %97 : vector<8x32xf32>
    %99 = math.tanh %98 : vector<8x32xf32>
    %100 = arith.mulf %95, %99 : vector<8x32xf32>
    %101 = vector.extract_strided_slice %84 {offsets = [0, 0], sizes = [8, 96], strides = [1, 1]} : vector<8x128xf32> to vector<8x96xf32>
    %102 = arith.negf %101 : vector<8x96xf32>
    %103 = math.exp %102 : vector<8x96xf32>
    %cst_30 = arith.constant 1.000000e+00 : f32
    %104 = vector.broadcast %cst_30 : f32 to vector<8x96xf32>
    %105 = arith.addf %104, %103 : vector<8x96xf32>
    %106 = arith.divf %104, %105 : vector<8x96xf32>
    %107 = vector.extract_strided_slice %84 {offsets = [0, 96], sizes = [8, 32], strides = [1, 1]} : vector<8x128xf32> to vector<8x32xf32>
    %108 = math.tanh %107 : vector<8x32xf32>
    %109 = vector.extract_strided_slice %106 {offsets = [0, 0], sizes = [8, 32], strides = [1, 1]} : vector<8x96xf32> to vector<8x32xf32>
    %110 = vector.extract_strided_slice %106 {offsets = [0, 32], sizes = [8, 32], strides = [1, 1]} : vector<8x96xf32> to vector<8x32xf32>
    %111 = vector.extract_strided_slice %106 {offsets = [0, 64], sizes = [8, 32], strides = [1, 1]} : vector<8x96xf32> to vector<8x32xf32>
    %112 = arith.mulf %110, %72 : vector<8x32xf32>
    %113 = arith.mulf %109, %108 : vector<8x32xf32>
    %114 = arith.addf %112, %113 : vector<8x32xf32>
    %115 = math.tanh %114 : vector<8x32xf32>
    %116 = arith.mulf %111, %115 : vector<8x32xf32>
    %c3_i32 = arith.constant 3 : i32
    %c8_i32_31 = arith.constant 8 : i32
    %117 = arith.muli %c3_i32, %c8_i32_31 : i32
    %118 = tpu.assume_multiple %117, 8 : i32
    %119 = arith.index_cast %118 : i32 to index
    %c0_32 = arith.constant 0 : index
    %120 = vector.load %arg14[%119, %c0_32] : memref<64x128xf32, #tpu.memory_space<vmem>>, vector<8x128xf32>
    %cst_33 = arith.constant dense<0.000000e+00> : vector<8x128xf32>
    %121 = tpu.matmul %100, %7, %cst_33 {dimension_numbers = #tpu.dot_dimension_numbers<[1], [0], [0], [1], [0, 0, 1, 1], [], []>} : vector<8x32xf32>, vector<32x128xf32>, vector<8x128xf32> -> vector<8x128xf32>
    %122 = arith.addf %120, %121 : vector<8x128xf32>
    %cst_34 = arith.constant dense<0.000000e+00> : vector<8x128xf32>
    %123 = tpu.matmul %100, %8, %cst_34 {dimension_numbers = #tpu.dot_dimension_numbers<[1], [0], [0], [1], [0, 0, 1, 1], [], []>} : vector<8x32xf32>, vector<32x128xf32>, vector<8x128xf32> -> vector<8x128xf32>
    %cst_35 = arith.constant dense<0.000000e+00> : vector<8x128xf32>
    %124 = tpu.matmul %116, %9, %cst_35 {dimension_numbers = #tpu.dot_dimension_numbers<[1], [0], [0], [1], [0, 0, 1, 1], [], []>} : vector<8x32xf32>, vector<32x128xf32>, vector<8x128xf32> -> vector<8x128xf32>
    %125 = arith.addf %123, %124 : vector<8x128xf32>
    %126 = arith.addf %125, %12 : vector<8x128xf32>
    %127 = vector.extract_strided_slice %122 {offsets = [0, 0], sizes = [8, 96], strides = [1, 1]} : vector<8x128xf32> to vector<8x96xf32>
    %128 = arith.negf %127 : vector<8x96xf32>
    %129 = math.exp %128 : vector<8x96xf32>
    %cst_36 = arith.constant 1.000000e+00 : f32
    %130 = vector.broadcast %cst_36 : f32 to vector<8x96xf32>
    %131 = arith.addf %130, %129 : vector<8x96xf32>
    %132 = arith.divf %130, %131 : vector<8x96xf32>
    %133 = vector.extract_strided_slice %122 {offsets = [0, 96], sizes = [8, 32], strides = [1, 1]} : vector<8x128xf32> to vector<8x32xf32>
    %134 = math.tanh %133 : vector<8x32xf32>
    %135 = vector.extract_strided_slice %132 {offsets = [0, 0], sizes = [8, 32], strides = [1, 1]} : vector<8x96xf32> to vector<8x32xf32>
    %136 = vector.extract_strided_slice %132 {offsets = [0, 32], sizes = [8, 32], strides = [1, 1]} : vector<8x96xf32> to vector<8x32xf32>
    %137 = vector.extract_strided_slice %132 {offsets = [0, 64], sizes = [8, 32], strides = [1, 1]} : vector<8x96xf32> to vector<8x32xf32>
    %138 = arith.mulf %136, %98 : vector<8x32xf32>
    %139 = arith.mulf %135, %134 : vector<8x32xf32>
    %140 = arith.addf %138, %139 : vector<8x32xf32>
    %141 = math.tanh %140 : vector<8x32xf32>
    %142 = arith.mulf %137, %141 : vector<8x32xf32>
    %143 = vector.extract_strided_slice %126 {offsets = [0, 0], sizes = [8, 96], strides = [1, 1]} : vector<8x128xf32> to vector<8x96xf32>
    %144 = arith.negf %143 : vector<8x96xf32>
    %145 = math.exp %144 : vector<8x96xf32>
    %cst_37 = arith.constant 1.000000e+00 : f32
    %146 = vector.broadcast %cst_37 : f32 to vector<8x96xf32>
    %147 = arith.addf %146, %145 : vector<8x96xf32>
    %148 = arith.divf %146, %147 : vector<8x96xf32>
    %149 = vector.extract_strided_slice %126 {offsets = [0, 96], sizes = [8, 32], strides = [1, 1]} : vector<8x128xf32> to vector<8x32xf32>
    %150 = math.tanh %149 : vector<8x32xf32>
    %151 = vector.extract_strided_slice %148 {offsets = [0, 0], sizes = [8, 32], strides = [1, 1]} : vector<8x96xf32> to vector<8x32xf32>
    %152 = vector.extract_strided_slice %148 {offsets = [0, 32], sizes = [8, 32], strides = [1, 1]} : vector<8x96xf32> to vector<8x32xf32>
    %153 = vector.extract_strided_slice %148 {offsets = [0, 64], sizes = [8, 32], strides = [1, 1]} : vector<8x96xf32> to vector<8x32xf32>
    %154 = arith.mulf %152, %114 : vector<8x32xf32>
    %155 = arith.mulf %151, %150 : vector<8x32xf32>
    %156 = arith.addf %154, %155 : vector<8x32xf32>
    %157 = math.tanh %156 : vector<8x32xf32>
    %158 = arith.mulf %153, %157 : vector<8x32xf32>
    %c4_i32 = arith.constant 4 : i32
    %c8_i32_38 = arith.constant 8 : i32
    %159 = arith.muli %c4_i32, %c8_i32_38 : i32
    %160 = tpu.assume_multiple %159, 8 : i32
    %161 = arith.index_cast %160 : i32 to index
    %c0_39 = arith.constant 0 : index
    %162 = vector.load %arg14[%161, %c0_39] : memref<64x128xf32, #tpu.memory_space<vmem>>, vector<8x128xf32>
    %cst_40 = arith.constant dense<0.000000e+00> : vector<8x128xf32>
    %163 = tpu.matmul %142, %7, %cst_40 {dimension_numbers = #tpu.dot_dimension_numbers<[1], [0], [0], [1], [0, 0, 1, 1], [], []>} : vector<8x32xf32>, vector<32x128xf32>, vector<8x128xf32> -> vector<8x128xf32>
    %164 = arith.addf %162, %163 : vector<8x128xf32>
    %cst_41 = arith.constant dense<0.000000e+00> : vector<8x128xf32>
    %165 = tpu.matmul %142, %8, %cst_41 {dimension_numbers = #tpu.dot_dimension_numbers<[1], [0], [0], [1], [0, 0, 1, 1], [], []>} : vector<8x32xf32>, vector<32x128xf32>, vector<8x128xf32> -> vector<8x128xf32>
    %cst_42 = arith.constant dense<0.000000e+00> : vector<8x128xf32>
    %166 = tpu.matmul %158, %9, %cst_42 {dimension_numbers = #tpu.dot_dimension_numbers<[1], [0], [0], [1], [0, 0, 1, 1], [], []>} : vector<8x32xf32>, vector<32x128xf32>, vector<8x128xf32> -> vector<8x128xf32>
    %167 = arith.addf %165, %166 : vector<8x128xf32>
    %168 = arith.addf %167, %12 : vector<8x128xf32>
    %169 = vector.extract_strided_slice %164 {offsets = [0, 0], sizes = [8, 96], strides = [1, 1]} : vector<8x128xf32> to vector<8x96xf32>
    %170 = arith.negf %169 : vector<8x96xf32>
    %171 = math.exp %170 : vector<8x96xf32>
    %cst_43 = arith.constant 1.000000e+00 : f32
    %172 = vector.broadcast %cst_43 : f32 to vector<8x96xf32>
    %173 = arith.addf %172, %171 : vector<8x96xf32>
    %174 = arith.divf %172, %173 : vector<8x96xf32>
    %175 = vector.extract_strided_slice %164 {offsets = [0, 96], sizes = [8, 32], strides = [1, 1]} : vector<8x128xf32> to vector<8x32xf32>
    %176 = math.tanh %175 : vector<8x32xf32>
    %177 = vector.extract_strided_slice %174 {offsets = [0, 0], sizes = [8, 32], strides = [1, 1]} : vector<8x96xf32> to vector<8x32xf32>
    %178 = vector.extract_strided_slice %174 {offsets = [0, 32], sizes = [8, 32], strides = [1, 1]} : vector<8x96xf32> to vector<8x32xf32>
    %179 = vector.extract_strided_slice %174 {offsets = [0, 64], sizes = [8, 32], strides = [1, 1]} : vector<8x96xf32> to vector<8x32xf32>
    %180 = arith.mulf %178, %140 : vector<8x32xf32>
    %181 = arith.mulf %177, %176 : vector<8x32xf32>
    %182 = arith.addf %180, %181 : vector<8x32xf32>
    %183 = math.tanh %182 : vector<8x32xf32>
    %184 = arith.mulf %179, %183 : vector<8x32xf32>
    %185 = vector.extract_strided_slice %168 {offsets = [0, 0], sizes = [8, 96], strides = [1, 1]} : vector<8x128xf32> to vector<8x96xf32>
    %186 = arith.negf %185 : vector<8x96xf32>
    %187 = math.exp %186 : vector<8x96xf32>
    %cst_44 = arith.constant 1.000000e+00 : f32
    %188 = vector.broadcast %cst_44 : f32 to vector<8x96xf32>
    %189 = arith.addf %188, %187 : vector<8x96xf32>
    %190 = arith.divf %188, %189 : vector<8x96xf32>
    %191 = vector.extract_strided_slice %168 {offsets = [0, 96], sizes = [8, 32], strides = [1, 1]} : vector<8x128xf32> to vector<8x32xf32>
    %192 = math.tanh %191 : vector<8x32xf32>
    %193 = vector.extract_strided_slice %190 {offsets = [0, 0], sizes = [8, 32], strides = [1, 1]} : vector<8x96xf32> to vector<8x32xf32>
    %194 = vector.extract_strided_slice %190 {offsets = [0, 32], sizes = [8, 32], strides = [1, 1]} : vector<8x96xf32> to vector<8x32xf32>
    %195 = vector.extract_strided_slice %190 {offsets = [0, 64], sizes = [8, 32], strides = [1, 1]} : vector<8x96xf32> to vector<8x32xf32>
    %196 = arith.mulf %194, %156 : vector<8x32xf32>
    %197 = arith.mulf %193, %192 : vector<8x32xf32>
    %198 = arith.addf %196, %197 : vector<8x32xf32>
    %199 = math.tanh %198 : vector<8x32xf32>
    %200 = arith.mulf %195, %199 : vector<8x32xf32>
    %c5_i32 = arith.constant 5 : i32
    %c8_i32_45 = arith.constant 8 : i32
    %201 = arith.muli %c5_i32, %c8_i32_45 : i32
    %202 = tpu.assume_multiple %201, 8 : i32
    %203 = arith.index_cast %202 : i32 to index
    %c0_46 = arith.constant 0 : index
    %204 = vector.load %arg14[%203, %c0_46] : memref<64x128xf32, #tpu.memory_space<vmem>>, vector<8x128xf32>
    %cst_47 = arith.constant dense<0.000000e+00> : vector<8x128xf32>
    %205 = tpu.matmul %184, %7, %cst_47 {dimension_numbers = #tpu.dot_dimension_numbers<[1], [0], [0], [1], [0, 0, 1, 1], [], []>} : vector<8x32xf32>, vector<32x128xf32>, vector<8x128xf32> -> vector<8x128xf32>
    %206 = arith.addf %204, %205 : vector<8x128xf32>
    %cst_48 = arith.constant dense<0.000000e+00> : vector<8x128xf32>
    %207 = tpu.matmul %184, %8, %cst_48 {dimension_numbers = #tpu.dot_dimension_numbers<[1], [0], [0], [1], [0, 0, 1, 1], [], []>} : vector<8x32xf32>, vector<32x128xf32>, vector<8x128xf32> -> vector<8x128xf32>
    %cst_49 = arith.constant dense<0.000000e+00> : vector<8x128xf32>
    %208 = tpu.matmul %200, %9, %cst_49 {dimension_numbers = #tpu.dot_dimension_numbers<[1], [0], [0], [1], [0, 0, 1, 1], [], []>} : vector<8x32xf32>, vector<32x128xf32>, vector<8x128xf32> -> vector<8x128xf32>
    %209 = arith.addf %207, %208 : vector<8x128xf32>
    %210 = arith.addf %209, %12 : vector<8x128xf32>
    %211 = vector.extract_strided_slice %206 {offsets = [0, 0], sizes = [8, 96], strides = [1, 1]} : vector<8x128xf32> to vector<8x96xf32>
    %212 = arith.negf %211 : vector<8x96xf32>
    %213 = math.exp %212 : vector<8x96xf32>
    %cst_50 = arith.constant 1.000000e+00 : f32
    %214 = vector.broadcast %cst_50 : f32 to vector<8x96xf32>
    %215 = arith.addf %214, %213 : vector<8x96xf32>
    %216 = arith.divf %214, %215 : vector<8x96xf32>
    %217 = vector.extract_strided_slice %206 {offsets = [0, 96], sizes = [8, 32], strides = [1, 1]} : vector<8x128xf32> to vector<8x32xf32>
    %218 = math.tanh %217 : vector<8x32xf32>
    %219 = vector.extract_strided_slice %216 {offsets = [0, 0], sizes = [8, 32], strides = [1, 1]} : vector<8x96xf32> to vector<8x32xf32>
    %220 = vector.extract_strided_slice %216 {offsets = [0, 32], sizes = [8, 32], strides = [1, 1]} : vector<8x96xf32> to vector<8x32xf32>
    %221 = vector.extract_strided_slice %216 {offsets = [0, 64], sizes = [8, 32], strides = [1, 1]} : vector<8x96xf32> to vector<8x32xf32>
    %222 = arith.mulf %220, %182 : vector<8x32xf32>
    %223 = arith.mulf %219, %218 : vector<8x32xf32>
    %224 = arith.addf %222, %223 : vector<8x32xf32>
    %225 = math.tanh %224 : vector<8x32xf32>
    %226 = arith.mulf %221, %225 : vector<8x32xf32>
    %227 = vector.extract_strided_slice %210 {offsets = [0, 0], sizes = [8, 96], strides = [1, 1]} : vector<8x128xf32> to vector<8x96xf32>
    %228 = arith.negf %227 : vector<8x96xf32>
    %229 = math.exp %228 : vector<8x96xf32>
    %cst_51 = arith.constant 1.000000e+00 : f32
    %230 = vector.broadcast %cst_51 : f32 to vector<8x96xf32>
    %231 = arith.addf %230, %229 : vector<8x96xf32>
    %232 = arith.divf %230, %231 : vector<8x96xf32>
    %233 = vector.extract_strided_slice %210 {offsets = [0, 96], sizes = [8, 32], strides = [1, 1]} : vector<8x128xf32> to vector<8x32xf32>
    %234 = math.tanh %233 : vector<8x32xf32>
    %235 = vector.extract_strided_slice %232 {offsets = [0, 0], sizes = [8, 32], strides = [1, 1]} : vector<8x96xf32> to vector<8x32xf32>
    %236 = vector.extract_strided_slice %232 {offsets = [0, 32], sizes = [8, 32], strides = [1, 1]} : vector<8x96xf32> to vector<8x32xf32>
    %237 = vector.extract_strided_slice %232 {offsets = [0, 64], sizes = [8, 32], strides = [1, 1]} : vector<8x96xf32> to vector<8x32xf32>
    %238 = arith.mulf %236, %198 : vector<8x32xf32>
    %239 = arith.mulf %235, %234 : vector<8x32xf32>
    %240 = arith.addf %238, %239 : vector<8x32xf32>
    %241 = math.tanh %240 : vector<8x32xf32>
    %242 = arith.mulf %237, %241 : vector<8x32xf32>
    %c6_i32 = arith.constant 6 : i32
    %c8_i32_52 = arith.constant 8 : i32
    %243 = arith.muli %c6_i32, %c8_i32_52 : i32
    %244 = tpu.assume_multiple %243, 8 : i32
    %245 = arith.index_cast %244 : i32 to index
    %c0_53 = arith.constant 0 : index
    %246 = vector.load %arg14[%245, %c0_53] : memref<64x128xf32, #tpu.memory_space<vmem>>, vector<8x128xf32>
    %cst_54 = arith.constant dense<0.000000e+00> : vector<8x128xf32>
    %247 = tpu.matmul %226, %7, %cst_54 {dimension_numbers = #tpu.dot_dimension_numbers<[1], [0], [0], [1], [0, 0, 1, 1], [], []>} : vector<8x32xf32>, vector<32x128xf32>, vector<8x128xf32> -> vector<8x128xf32>
    %248 = arith.addf %246, %247 : vector<8x128xf32>
    %cst_55 = arith.constant dense<0.000000e+00> : vector<8x128xf32>
    %249 = tpu.matmul %226, %8, %cst_55 {dimension_numbers = #tpu.dot_dimension_numbers<[1], [0], [0], [1], [0, 0, 1, 1], [], []>} : vector<8x32xf32>, vector<32x128xf32>, vector<8x128xf32> -> vector<8x128xf32>
    %cst_56 = arith.constant dense<0.000000e+00> : vector<8x128xf32>
    %250 = tpu.matmul %242, %9, %cst_56 {dimension_numbers = #tpu.dot_dimension_numbers<[1], [0], [0], [1], [0, 0, 1, 1], [], []>} : vector<8x32xf32>, vector<32x128xf32>, vector<8x128xf32> -> vector<8x128xf32>
    %251 = arith.addf %249, %250 : vector<8x128xf32>
    %252 = arith.addf %251, %12 : vector<8x128xf32>
    %253 = vector.extract_strided_slice %248 {offsets = [0, 0], sizes = [8, 96], strides = [1, 1]} : vector<8x128xf32> to vector<8x96xf32>
    %254 = arith.negf %253 : vector<8x96xf32>
    %255 = math.exp %254 : vector<8x96xf32>
    %cst_57 = arith.constant 1.000000e+00 : f32
    %256 = vector.broadcast %cst_57 : f32 to vector<8x96xf32>
    %257 = arith.addf %256, %255 : vector<8x96xf32>
    %258 = arith.divf %256, %257 : vector<8x96xf32>
    %259 = vector.extract_strided_slice %248 {offsets = [0, 96], sizes = [8, 32], strides = [1, 1]} : vector<8x128xf32> to vector<8x32xf32>
    %260 = math.tanh %259 : vector<8x32xf32>
    %261 = vector.extract_strided_slice %258 {offsets = [0, 0], sizes = [8, 32], strides = [1, 1]} : vector<8x96xf32> to vector<8x32xf32>
    %262 = vector.extract_strided_slice %258 {offsets = [0, 32], sizes = [8, 32], strides = [1, 1]} : vector<8x96xf32> to vector<8x32xf32>
    %263 = vector.extract_strided_slice %258 {offsets = [0, 64], sizes = [8, 32], strides = [1, 1]} : vector<8x96xf32> to vector<8x32xf32>
    %264 = arith.mulf %262, %224 : vector<8x32xf32>
    %265 = arith.mulf %261, %260 : vector<8x32xf32>
    %266 = arith.addf %264, %265 : vector<8x32xf32>
    %267 = math.tanh %266 : vector<8x32xf32>
    %268 = arith.mulf %263, %267 : vector<8x32xf32>
    %269 = vector.extract_strided_slice %252 {offsets = [0, 0], sizes = [8, 96], strides = [1, 1]} : vector<8x128xf32> to vector<8x96xf32>
    %270 = arith.negf %269 : vector<8x96xf32>
    %271 = math.exp %270 : vector<8x96xf32>
    %cst_58 = arith.constant 1.000000e+00 : f32
    %272 = vector.broadcast %cst_58 : f32 to vector<8x96xf32>
    %273 = arith.addf %272, %271 : vector<8x96xf32>
    %274 = arith.divf %272, %273 : vector<8x96xf32>
    %275 = vector.extract_strided_slice %252 {offsets = [0, 96], sizes = [8, 32], strides = [1, 1]} : vector<8x128xf32> to vector<8x32xf32>
    %276 = math.tanh %275 : vector<8x32xf32>
    %277 = vector.extract_strided_slice %274 {offsets = [0, 0], sizes = [8, 32], strides = [1, 1]} : vector<8x96xf32> to vector<8x32xf32>
    %278 = vector.extract_strided_slice %274 {offsets = [0, 32], sizes = [8, 32], strides = [1, 1]} : vector<8x96xf32> to vector<8x32xf32>
    %279 = vector.extract_strided_slice %274 {offsets = [0, 64], sizes = [8, 32], strides = [1, 1]} : vector<8x96xf32> to vector<8x32xf32>
    %280 = arith.mulf %278, %240 : vector<8x32xf32>
    %281 = arith.mulf %277, %276 : vector<8x32xf32>
    %282 = arith.addf %280, %281 : vector<8x32xf32>
    %283 = math.tanh %282 : vector<8x32xf32>
    %284 = arith.mulf %279, %283 : vector<8x32xf32>
    %c7_i32 = arith.constant 7 : i32
    %c8_i32_59 = arith.constant 8 : i32
    %285 = arith.muli %c7_i32, %c8_i32_59 : i32
    %286 = tpu.assume_multiple %285, 8 : i32
    %287 = arith.index_cast %286 : i32 to index
    %c0_60 = arith.constant 0 : index
    %288 = vector.load %arg14[%287, %c0_60] : memref<64x128xf32, #tpu.memory_space<vmem>>, vector<8x128xf32>
    %cst_61 = arith.constant dense<0.000000e+00> : vector<8x128xf32>
    %289 = tpu.matmul %268, %7, %cst_61 {dimension_numbers = #tpu.dot_dimension_numbers<[1], [0], [0], [1], [0, 0, 1, 1], [], []>} : vector<8x32xf32>, vector<32x128xf32>, vector<8x128xf32> -> vector<8x128xf32>
    %290 = arith.addf %288, %289 : vector<8x128xf32>
    %cst_62 = arith.constant dense<0.000000e+00> : vector<8x128xf32>
    %291 = tpu.matmul %268, %8, %cst_62 {dimension_numbers = #tpu.dot_dimension_numbers<[1], [0], [0], [1], [0, 0, 1, 1], [], []>} : vector<8x32xf32>, vector<32x128xf32>, vector<8x128xf32> -> vector<8x128xf32>
    %cst_63 = arith.constant dense<0.000000e+00> : vector<8x128xf32>
    %292 = tpu.matmul %284, %9, %cst_63 {dimension_numbers = #tpu.dot_dimension_numbers<[1], [0], [0], [1], [0, 0, 1, 1], [], []>} : vector<8x32xf32>, vector<32x128xf32>, vector<8x128xf32> -> vector<8x128xf32>
    %293 = arith.addf %291, %292 : vector<8x128xf32>
    %294 = arith.addf %293, %12 : vector<8x128xf32>
    %295 = vector.extract_strided_slice %290 {offsets = [0, 0], sizes = [8, 96], strides = [1, 1]} : vector<8x128xf32> to vector<8x96xf32>
    %296 = arith.negf %295 : vector<8x96xf32>
    %297 = math.exp %296 : vector<8x96xf32>
    %cst_64 = arith.constant 1.000000e+00 : f32
    %298 = vector.broadcast %cst_64 : f32 to vector<8x96xf32>
    %299 = arith.addf %298, %297 : vector<8x96xf32>
    %300 = arith.divf %298, %299 : vector<8x96xf32>
    %301 = vector.extract_strided_slice %290 {offsets = [0, 96], sizes = [8, 32], strides = [1, 1]} : vector<8x128xf32> to vector<8x32xf32>
    %302 = math.tanh %301 : vector<8x32xf32>
    %303 = vector.extract_strided_slice %300 {offsets = [0, 0], sizes = [8, 32], strides = [1, 1]} : vector<8x96xf32> to vector<8x32xf32>
    %304 = vector.extract_strided_slice %300 {offsets = [0, 32], sizes = [8, 32], strides = [1, 1]} : vector<8x96xf32> to vector<8x32xf32>
    %305 = vector.extract_strided_slice %300 {offsets = [0, 64], sizes = [8, 32], strides = [1, 1]} : vector<8x96xf32> to vector<8x32xf32>
    %306 = arith.mulf %304, %266 : vector<8x32xf32>
    %307 = arith.mulf %303, %302 : vector<8x32xf32>
    %308 = arith.addf %306, %307 : vector<8x32xf32>
    %309 = math.tanh %308 : vector<8x32xf32>
    %310 = arith.mulf %305, %309 : vector<8x32xf32>
    %311 = vector.extract_strided_slice %294 {offsets = [0, 0], sizes = [8, 96], strides = [1, 1]} : vector<8x128xf32> to vector<8x96xf32>
    %312 = arith.negf %311 : vector<8x96xf32>
    %313 = math.exp %312 : vector<8x96xf32>
    %cst_65 = arith.constant 1.000000e+00 : f32
    %314 = vector.broadcast %cst_65 : f32 to vector<8x96xf32>
    %315 = arith.addf %314, %313 : vector<8x96xf32>
    %316 = arith.divf %314, %315 : vector<8x96xf32>
    %317 = vector.extract_strided_slice %294 {offsets = [0, 96], sizes = [8, 32], strides = [1, 1]} : vector<8x128xf32> to vector<8x32xf32>
    %318 = math.tanh %317 : vector<8x32xf32>
    %319 = vector.extract_strided_slice %316 {offsets = [0, 0], sizes = [8, 32], strides = [1, 1]} : vector<8x96xf32> to vector<8x32xf32>
    %320 = vector.extract_strided_slice %316 {offsets = [0, 32], sizes = [8, 32], strides = [1, 1]} : vector<8x96xf32> to vector<8x32xf32>
    %321 = vector.extract_strided_slice %316 {offsets = [0, 64], sizes = [8, 32], strides = [1, 1]} : vector<8x96xf32> to vector<8x32xf32>
    %322 = arith.mulf %320, %282 : vector<8x32xf32>
    %323 = arith.mulf %319, %318 : vector<8x32xf32>
    %324 = arith.addf %322, %323 : vector<8x32xf32>
    %325 = math.tanh %324 : vector<8x32xf32>
    %326 = arith.mulf %321, %325 : vector<8x32xf32>
    %c7_i32_66 = arith.constant 7 : i32
    %cst_67 = arith.constant dense<0.000000e+00> : vector<8x128xf32>
    %327 = tpu.matmul %310, %8, %cst_67 {dimension_numbers = #tpu.dot_dimension_numbers<[1], [0], [0], [1], [0, 0, 1, 1], [], []>} : vector<8x32xf32>, vector<32x128xf32>, vector<8x128xf32> -> vector<8x128xf32>
    %cst_68 = arith.constant dense<0.000000e+00> : vector<8x128xf32>
    %328 = tpu.matmul %326, %9, %cst_68 {dimension_numbers = #tpu.dot_dimension_numbers<[1], [0], [0], [1], [0, 0, 1, 1], [], []>} : vector<8x32xf32>, vector<32x128xf32>, vector<8x128xf32> -> vector<8x128xf32>
    %329 = arith.addf %327, %328 : vector<8x128xf32>
    %330 = arith.addf %329, %12 : vector<8x128xf32>
    %331 = vector.extract_strided_slice %330 {offsets = [0, 0], sizes = [8, 96], strides = [1, 1]} : vector<8x128xf32> to vector<8x96xf32>
    %332 = arith.negf %331 : vector<8x96xf32>
    %333 = math.exp %332 : vector<8x96xf32>
    %cst_69 = arith.constant 1.000000e+00 : f32
    %334 = vector.broadcast %cst_69 : f32 to vector<8x96xf32>
    %335 = arith.addf %334, %333 : vector<8x96xf32>
    %336 = arith.divf %334, %335 : vector<8x96xf32>
    %337 = vector.extract_strided_slice %330 {offsets = [0, 96], sizes = [8, 32], strides = [1, 1]} : vector<8x128xf32> to vector<8x32xf32>
    %338 = math.tanh %337 : vector<8x32xf32>
    %339 = vector.extract_strided_slice %336 {offsets = [0, 0], sizes = [8, 32], strides = [1, 1]} : vector<8x96xf32> to vector<8x32xf32>
    %340 = vector.extract_strided_slice %336 {offsets = [0, 32], sizes = [8, 32], strides = [1, 1]} : vector<8x96xf32> to vector<8x32xf32>
    %341 = vector.extract_strided_slice %336 {offsets = [0, 64], sizes = [8, 32], strides = [1, 1]} : vector<8x96xf32> to vector<8x32xf32>
    %342 = arith.mulf %340, %324 : vector<8x32xf32>
    %343 = arith.mulf %339, %338 : vector<8x32xf32>
    %344 = arith.addf %342, %343 : vector<8x32xf32>
    %345 = math.tanh %344 : vector<8x32xf32>
    %346 = arith.mulf %341, %345 : vector<8x32xf32>
    %c0_70 = arith.constant 0 : index
    %c0_71 = arith.constant 0 : index
    %347 = vector.load %arg7[%c0_70, %c0_71] : memref<1x32xf32, #tpu.memory_space<vmem>>, vector<1x32xf32>
    %348 = vector.broadcast %347 : vector<1x32xf32> to vector<8x32xf32>
    %349 = arith.mulf %346, %348 : vector<8x32xf32>
    %c0_72 = arith.constant 0 : index
    %c0_73 = arith.constant 0 : index
    %350 = vector.load %arg8[%c0_72, %c0_73] : memref<1x32xf32, #tpu.memory_space<vmem>>, vector<1x32xf32>
    %351 = vector.broadcast %350 : vector<1x32xf32> to vector<8x32xf32>
    %352 = arith.addf %349, %351 : vector<8x32xf32>
    %c0_74 = arith.constant 0 : index
    %c0_75 = arith.constant 0 : index
    %353 = vector.load %arg9[%c0_74, %c0_75] : memref<32x16xf32, #tpu.memory_space<vmem>>, vector<32x16xf32>
    %cst_76 = arith.constant dense<0.000000e+00> : vector<8x16xf32>
    %354 = tpu.matmul %352, %353, %cst_76 {dimension_numbers = #tpu.dot_dimension_numbers<[1], [0], [0], [1], [0, 0, 1, 1], [], []>} : vector<8x32xf32>, vector<32x16xf32>, vector<8x16xf32> -> vector<8x16xf32>
    %c0_77 = arith.constant 0 : index
    %c0_78 = arith.constant 0 : index
    %355 = vector.load %arg10[%c0_77, %c0_78] : memref<1x16xf32, #tpu.memory_space<vmem>>, vector<1x16xf32>
    %356 = vector.broadcast %355 : vector<1x16xf32> to vector<8x16xf32>
    %357 = arith.addf %354, %356 : vector<8x16xf32>
    %cst_79 = arith.constant 0.000000e+00 : f32
    %358 = vector.broadcast %cst_79 : f32 to vector<8x16xf32>
    %359 = arith.maximumf %357, %358 : vector<8x16xf32>
    %c0_80 = arith.constant 0 : index
    %c0_81 = arith.constant 0 : index
    %360 = vector.load %arg11[%c0_80, %c0_81] : memref<1x16xf32, #tpu.memory_space<vmem>>, vector<1x16xf32>
    %361 = vector.broadcast %360 : vector<1x16xf32> to vector<8x16xf32>
    %362 = arith.mulf %359, %361 : vector<8x16xf32>
    %cst_82 = arith.constant dense<0.000000e+00> : vector<8xf32>
    %363 = vector.multi_reduction <add>, %362, %cst_82 [1] : vector<8x16xf32> to vector<8xf32>
    %364 = vector.shape_cast %363 : vector<8xf32> to vector<8x1xf32>
    %c0_83 = arith.constant 0 : index
    %c0_84 = arith.constant 0 : index
    %365 = vector.load %arg12[%c0_83, %c0_84] : memref<1x1xf32, #tpu.memory_space<vmem>>, vector<1x1xf32>
    %366 = vector.broadcast %365 : vector<1x1xf32> to vector<8x1xf32>
    %367 = arith.addf %364, %366 : vector<8x1xf32>
    %368 = arith.negf %367 : vector<8x1xf32>
    %369 = math.exp %368 : vector<8x1xf32>
    %cst_85 = arith.constant 1.000000e+00 : f32
    %370 = vector.broadcast %cst_85 : f32 to vector<8x1xf32>
    %371 = arith.addf %370, %369 : vector<8x1xf32>
    %372 = arith.divf %370, %371 : vector<8x1xf32>
    %c0_86 = arith.constant 0 : index
    %c0_87 = arith.constant 0 : index
    %373 = vector.load %arg13[%c0_86, %c0_87] : memref<8x1xf32, #tpu.memory_space<vmem>>, vector<8x1xf32>
    tpu.vector_store %arg13[%c0_86, %c0_87], %372 {strides = array<i32>} : memref<8x1xf32, #tpu.memory_space<vmem>>, vector<8x1xf32>,
    return
  }
}

</mosaic_0001>

<llo_original>
// kernel: lstm_binary_classifier.1
$region0: #{lstm_binary_classifier.1}
  #allocation0 [shape = 'u32[]', space=smem, size = 0x4, offset = 0x4, fixed_abs, tag = 'smem constant byte address 0x4 - core index']
  #allocation1 [shape = 'u32[144,128]{1,0:T(1,128)}', space=vmem, size = 0x12000, scoped, tag = 'internal scratch']
  #allocation2 [shape = 'f32[64,128]{1,0:T(8,128)}', space=vmem, size = 0x8000, scoped, tag = 'scratch operand']
  #allocation3 [shape = 'f32[1,1]{1,0:T(1,128)S(1)}', space=vmem, size = 0x200, scoped, tag = 'scoped memory for lstm_binary_classifier.1']
  %s0 = inlined_call_operand.vmem [shape: f32[64,16], index: 0, kind: input, shape index: {}]
  %s1 = inlined_call_operand.vmem [shape: f32[16,128], index: 1, kind: input, shape index: {}]
  %s2 = inlined_call_operand.vmem [shape: f32[32,128], index: 2, kind: input, shape index: {}]
  %s3 = inlined_call_operand.vmem [shape: f32[1,128], index: 3, kind: input, shape index: {}]
  %s4 = inlined_call_operand.vmem [shape: f32[32,128], index: 4, kind: input, shape index: {}]
  %s5 = inlined_call_operand.vmem [shape: f32[32,128], index: 5, kind: input, shape index: {}]
  %s6 = inlined_call_operand.vmem [shape: f32[1,128], index: 6, kind: input, shape index: {}]
  %s7 = inlined_call_operand.vmem [shape: f32[1,32], index: 7, kind: input, shape index: {}]
  %s8 = inlined_call_operand.vmem [shape: f32[1,32], index: 8, kind: input, shape index: {}]
  %s9 = inlined_call_operand.vmem [shape: f32[32,16], index: 9, kind: input, shape index: {}]
  %s10 = inlined_call_operand.vmem [shape: f32[1,16], index: 10, kind: input, shape index: {}]
  %s11 = inlined_call_operand.vmem [shape: f32[1,16], index: 11, kind: input, shape index: {}]
  %s12 = inlined_call_operand.<no memory space> [shape: f32[1,1], index: 12, kind: input, shape index: {}]
  %s13 = inlined_call_operand.vmem [shape: f32[8,1], index: 13, kind: output, shape index: {}]
  %s14 = sld [smem:[#allocation0]]
  $region62: #{lstm_binary_classifier.1} parent=0
    _
  %s16 = ssub.s32 1, %s14
  %s17 = scalar_select 0, %s16, %s14
  %v18 = vstv %s12
  %19 = vst [vmem:[#allocation3] sm:$0x1] %v18
  // Predicated region
  $region2: #{lstm_binary_classifier.1} parent=0 // pred_check
    _
  $region3: #{lstm_binary_classifier.1} parent=0 // pred_check_branch
    %21 = sbr.rel (0) target = $region5
  $region4: #{lstm_binary_classifier.1} parent=0 // pred_region
    _
  $region5: #{lstm_binary_classifier.1} parent=0 // pred_fallthru
    _
  // Predicated region
  $region6: #{lstm_binary_classifier.1} parent=0 // pred_check
    _
  $region7: #{lstm_binary_classifier.1} parent=0 // pred_check_branch
    %23 = sbr.rel (0) target = $region9
  $region8: #{lstm_binary_classifier.1} parent=0 // pred_region
    _
  $region9: #{lstm_binary_classifier.1} parent=0 // pred_fallthru
    _
  // Predicated region
  $region10: #{lstm_binary_classifier.1} parent=0 // pred_check
    _
  $region11: #{lstm_binary_classifier.1} parent=0 // pred_check_branch
    %25 = sbr.rel (0) target = $region13
  $region12: #{lstm_binary_classifier.1} parent=0 // pred_region
    _
  $region13: #{lstm_binary_classifier.1} parent=0 // pred_fallthru
    _
  // Predicated region
  $region14: #{lstm_binary_classifier.1} parent=0 // pred_check
    _
  $region15: #{lstm_binary_classifier.1} parent=0 // pred_check_branch
    %27 = sbr.rel (0) target = $region17
  $region16: #{lstm_binary_classifier.1} parent=0 // pred_region
    _
  $region17: #{lstm_binary_classifier.1} parent=0 // pred_fallthru
    _
  // Predicated region
  $region18: #{lstm_binary_classifier.1} parent=0 // pred_check
    _
  $region19: #{lstm_binary_classifier.1} parent=0 // pred_check_branch
    %29 = sbr.rel (0) target = $region21
  $region20: #{lstm_binary_classifier.1} parent=0 // pred_region
    _
  $region21: #{lstm_binary_classifier.1} parent=0 // pred_fallthru
    _
  // Predicated region
  $region22: #{lstm_binary_classifier.1} parent=0 // pred_check
    _
  $region23: #{lstm_binary_classifier.1} parent=0 // pred_check_branch
    %31 = sbr.rel (0) target = $region25
  $region24: #{lstm_binary_classifier.1} parent=0 // pred_region
    _
  $region25: #{lstm_binary_classifier.1} parent=0 // pred_fallthru
    _
  // Predicated region
  $region26: #{lstm_binary_classifier.1} parent=0 // pred_check
    _
  $region27: #{lstm_binary_classifier.1} parent=0 // pred_check_branch
    %33 = sbr.rel (0) target = $region29
  $region28: #{lstm_binary_classifier.1} parent=0 // pred_region
    _
  $region29: #{lstm_binary_classifier.1} parent=0 // pred_fallthru
    _
  // Predicated region
  $region30: #{lstm_binary_classifier.1} parent=0 // pred_check
    _
  $region31: #{lstm_binary_classifier.1} parent=0 // pred_check_branch
    %35 = sbr.rel (0) target = $region33
  $region32: #{lstm_binary_classifier.1} parent=0 // pred_region
    _
  $region33: #{lstm_binary_classifier.1} parent=0 // pred_fallthru
    _
  // Predicated region
  $region34: #{lstm_binary_classifier.1} parent=0 // pred_check
    _
  $region35: #{lstm_binary_classifier.1} parent=0 // pred_check_branch
    %37 = sbr.rel (0) target = $region37
  $region36: #{lstm_binary_classifier.1} parent=0 // pred_region
    _
  $region37: #{lstm_binary_classifier.1} parent=0 // pred_fallthru
    _
  // Predicated region
  $region38: #{lstm_binary_classifier.1} parent=0 // pred_check
    _
  $region39: #{lstm_binary_classifier.1} parent=0 // pred_check_branch
    %39 = sbr.rel (0) target = $region41
  $region40: #{lstm_binary_classifier.1} parent=0 // pred_region
    _
  $region41: #{lstm_binary_classifier.1} parent=0 // pred_fallthru
    _
  // Predicated region
  $region42: #{lstm_binary_classifier.1} parent=0 // pred_check
    _
  $region43: #{lstm_binary_classifier.1} parent=0 // pred_check_branch
    %41 = sbr.rel (0) target = $region45
  $region44: #{lstm_binary_classifier.1} parent=0 // pred_region
    _
  $region45: #{lstm_binary_classifier.1} parent=0 // pred_fallthru
    _
  // Predicated region
  $region46: #{lstm_binary_classifier.1} parent=0 // pred_check
    _
  $region47: #{lstm_binary_classifier.1} parent=0 // pred_check_branch
    %43 = sbr.rel (0) target = $region49
  $region48: #{lstm_binary_classifier.1} parent=0 // pred_region
    _
  $region49: #{lstm_binary_classifier.1} parent=0 // pred_fallthru
    _
  // Predicated region
  $region50: #{lstm_binary_classifier.1} parent=0 // pred_check
    _
  $region51: #{lstm_binary_classifier.1} parent=0 // pred_check_branch
    %45 = sbr.rel (0) target = $region53
  $region52: #{lstm_binary_classifier.1} parent=0 // pred_region
    _
  $region53: #{lstm_binary_classifier.1} parent=0 // pred_fallthru
    _
  %v46 = vld [vmem:[%s0] sm:$0xff]
  %v47 = vld [vmem:[%s0 + $0x8] sm:$0xff]
  %v48 = vld [vmem:[%s0 + $0x10] sm:$0xff]
  %v49 = vld [vmem:[%s0 + $0x18] sm:$0xff]
  %v50 = vld [vmem:[%s0 + $0x20] sm:$0xff]
  %v51 = vld [vmem:[%s0 + $0x28] sm:$0xff]
  %v52 = vld [vmem:[%s0 + $0x30] sm:$0xff]
  %v53 = vld [vmem:[%s0 + $0x38] sm:$0xff]
  %v54 = vld [vmem:[%s1] sm:$0xff]
  %v55 = vld [vmem:[%s1 + $0x8] sm:$0xff]
  %v56 = vld [vmem:[%s3] sm:$0x1]
  %v58 = vlaneseq
  %v59 = vshrl.u32 %v58, 7
  %v60 = vsub.s32 0, %v59
  %v61 = vrot.slane %v56, %v60
  %vm63 = vcmask 130048
  %v65 = vsel %vm63, %v46, 0
  %v68 = vsel %vm63, %v47, 0
  %v71 = vsel %vm63, %v48, 0
  %v74 = vsel %vm63, %v49, 0
  %v77 = vsel %vm63, %v50, 0
  %v80 = vsel %vm63, %v51, 0
  %v83 = vsel %vm63, %v52, 0
  %v86 = vsel %vm63, %v53, 0
  %88 = vmatprep.subr.mxu0 0.0
  %89 = vmatpush1.msra.mxu0 %v54
  %90 = vmatprep.subr.mxu0 0.0
  %91 = vmatpush1.msra.mxu0 %v55
  %92 = vmatprep.subr.mxu0 0.0
  %93 = vmatpush1.msra.mxu0 0.0
  %94 = vmatprep.subr.mxu0 0.0
  %95 = vmatpush1.msra.mxu0 0.0
  %96 = vmatprep.subr.mxu0 0.0
  %97 = vmatpush1.msra.mxu0 0.0
  %98 = vmatprep.subr.mxu0 0.0
  %99 = vmatpush1.msra.mxu0 0.0
  %100 = vmatprep.subr.mxu0 0.0
  %101 = vmatpush1.msra.mxu0 0.0
  %102 = vmatprep.subr.mxu0 0.0
  %103 = vmatpush1.msra.mxu0 0.0
  %104 = vmatprep.subr.mxu0 0.0
  %105 = vmatpush1.msra.mxu0 0.0
  %106 = vmatprep.subr.mxu0 0.0
  %107 = vmatpush1.msra.mxu0 0.0
  %108 = vmatprep.subr.mxu0 0.0
  %109 = vmatpush1.msra.mxu0 0.0
  %110 = vmatprep.subr.mxu0 0.0
  %111 = vmatpush1.msra.mxu0 0.0
  %112 = vmatprep.subr.mxu0 0.0
  %113 = vmatpush1.msra.mxu0 0.0
  %114 = vmatprep.subr.mxu0 0.0
  %115 = vmatpush1.msra.mxu0 0.0
  %116 = vmatprep.subr.mxu0 0.0
  %117 = vmatpush1.msra.mxu0 0.0
  %118 = vmatprep.subr.mxu0 0.0
  %119 = vmatpush1.msra.mxu0 0.0
  %120 = vmatprep.subr.mxu0 0.0
  %121 = vmatpush1.msra.mxu0 0.0
  %122 = vmatprep.subr.mxu0 0.0
  %123 = vmatpush1.msra.mxu0 0.0
  %124 = vmatprep.subr.mxu0 0.0
  %125 = vmatpush1.msra.mxu0 0.0
  %126 = vmatprep.subr.mxu0 0.0
  %127 = vmatpush1.msra.mxu0 0.0
  %128 = vmatprep.subr.mxu0 0.0
  %129 = vmatpush1.msra.mxu0 0.0
  %130 = vmatprep.subr.mxu0 0.0
  %131 = vmatpush1.msra.mxu0 0.0
  %132 = vmatprep.subr.mxu0 0.0
  %133 = vmatpush1.msra.mxu0 0.0
  %134 = vmatprep.subr.mxu0 0.0
  %135 = vmatpush1.msra.mxu0 0.0
  %136 = vmatprep.subr.mxu0 0.0
  %137 = vmatpush1.msra.mxu0 0.0
  %138 = vmatprep.subr.mxu0 0.0
  %139 = vmatpush1.msra.mxu0 0.0
  %140 = vmatprep.subr.mxu0 0.0
  %141 = vmatpush1.msra.mxu0 0.0
  %142 = vmatprep.subr.mxu0 0.0
  %143 = vmatpush1.msra.mxu0 0.0
  %144 = vmatprep.subr.mxu0 0.0
  %145 = vmatpush1.msra.mxu0 0.0
  %146 = vmatprep.subr.mxu0 0.0
  %147 = vmatpush1.msra.mxu0 0.0
  %148 = vmatprep.subr.mxu0 0.0
  %149 = vmatpush1.msra.mxu0 0.0
  %150 = vmatprep.subr.mxu0 0.0
  %151 = vmatpush1.msra.mxu0 0.0
  %152 = vmatprep.mubr.f32.mxu0 0.0
  %153 = vmatmul.mubr.f32.gmra.mrb[0].mxu0 %v65
  %v154 = vpop.f32.mrb[0].mxu0
  %v155 = vadd.f32 %v61, %v154
  %v156 = vpop.f32.mrb[0].mxu0
  %157 = vmatprep.mubr.f32.mxu0 0.0
  %158 = vmatmul.mubr.f32.gmra.mrb[0].mxu0 %v68
  %v159 = vpop.f32.mrb[0].mxu0
  %v160 = vadd.f32 %v61, %v159
  %v161 = vpop.f32.mrb[0].mxu0
  %162 = vmatprep.mubr.f32.mxu0 0.0
  %163 = vmatmul.mubr.f32.gmra.mrb[0].mxu0 %v71
  %v164 = vpop.f32.mrb[0].mxu0
  %v165 = vadd.f32 %v61, %v164
  %v166 = vpop.f32.mrb[0].mxu0
  %167 = vmatprep.mubr.f32.mxu0 0.0
  %168 = vmatmul.mubr.f32.gmra.mrb[0].mxu0 %v74
  %v169 = vpop.f32.mrb[0].mxu0
  %v170 = vadd.f32 %v61, %v169
  %v171 = vpop.f32.mrb[0].mxu0
  %172 = vmatprep.mubr.f32.mxu0 0.0
  %173 = vmatmul.mubr.f32.gmra.mrb[0].mxu0 %v77
  %v174 = vpop.f32.mrb[0].mxu0
  %v175 = vadd.f32 %v61, %v174
  %v176 = vpop.f32.mrb[0].mxu0
  %177 = vmatprep.mubr.f32.mxu0 0.0
  %178 = vmatmul.mubr.f32.gmra.mrb[0].mxu0 %v80
  %v179 = vpop.f32.mrb[0].mxu0
  %v180 = vadd.f32 %v61, %v179
  %v181 = vpop.f32.mrb[0].mxu0
  %182 = vmatprep.mubr.f32.mxu0 0.0
  %183 = vmatmul.mubr.f32.gmra.mrb[0].mxu0 %v83
  %v184 = vpop.f32.mrb[0].mxu0
  %v185 = vadd.f32 %v61, %v184
  %v186 = vpop.f32.mrb[0].mxu0
  %187 = vmatprep.mubr.f32.mxu0 0.0
  %188 = vmatmul.mubr.f32.gmra.mrb[0].mxu0 %v86
  %v189 = vpop.f32.mrb[0].mxu0
  %v190 = vadd.f32 %v61, %v189
  %v191 = vpop.f32.mrb[0].mxu0
  %192 = vdwg.mxu0
  %193 = vst [vmem:[#allocation2] sm:$0xff] %v155
  %194 = vst [vmem:[#allocation2 + $0x8] sm:$0xff] %v160
  %195 = vst [vmem:[#allocation2 + $0x10] sm:$0xff] %v165
  %196 = vst [vmem:[#allocation2 + $0x18] sm:$0xff] %v170
  %197 = vst [vmem:[#allocation2 + $0x20] sm:$0xff] %v175
  %198 = vst [vmem:[#allocation2 + $0x28] sm:$0xff] %v180
  %199 = vst [vmem:[#allocation2 + $0x30] sm:$0xff] %v185
  %200 = vst [vmem:[#allocation2 + $0x38] sm:$0xff] %v190
  %v201 = vld [vmem:[%s2] sm:$0xff]
  %v202 = vld [vmem:[%s2 + $0x8] sm:$0xff]
  %v203 = vld [vmem:[%s2 + $0x10] sm:$0xff]
  %v204 = vld [vmem:[%s2 + $0x18] sm:$0xff]
  %v205 = vld [vmem:[%s4] sm:$0xff]
  %v206 = vld [vmem:[%s4 + $0x8] sm:$0xff]
  %v207 = vld [vmem:[%s4 + $0x10] sm:$0xff]
  %v208 = vld [vmem:[%s4 + $0x18] sm:$0xff]
  %v209 = vld [vmem:[%s5] sm:$0xff]
  %v210 = vld [vmem:[%s5 + $0x8] sm:$0xff]
  %v211 = vld [vmem:[%s5 + $0x10] sm:$0xff]
  %v212 = vld [vmem:[%s5 + $0x18] sm:$0xff]
  %v213 = vld [vmem:[%s6] sm:$0x1]
  %v215 = vlaneseq
  %v216 = vshrl.u32 %v215, 7
  %v217 = vsub.s32 0, %v216
  %v218 = vrot.slane %v213, %v217
  %v220 = vld [vmem:[#allocation2] sm:$0xff]
  %v221 = vxor.u32 %v220, 2147483648
  %v222 = vmul.f32 %v221, 1.442695
  %v223 = vpow.pop %v222
  %v224 = vadd.f32 %v223, 1.0
  %v225 = vrcp.pop %v224
  %v226 = vmul.f32 1.0, %v225
  %v227 = vtanh.pop %v220
  %v228 = vmul.f32 %v226, 0.0
  %230 = vrot.lane.b32.xlu0 %v227, 32
  %v231 = vpop.permute.xlu0 %230
  %v233 = vmul.f32 %v226, %v231
  %235 = vrot.lane.b32.xlu0 %v233, 32
  %v236 = vpop.permute.xlu0 %235
  %v238 = vadd.f32 %v228, %v236
  %v239 = vtanh.pop %v238
  %241 = vrot.lane.b32.xlu0 %v239, 32
  %v242 = vpop.permute.xlu0 %241
  %v244 = vmul.f32 %v226, %v242
  %s245 = scalar_lea.vmem [#allocation2], 8
  %v246 = vld [vmem:[%s245] sm:$0xff]
  %248 = vrot.lane.b32.xlu0 %v244, 64
  %v249 = vpop.permute.xlu0 %248
  %vm250 = vcmask 261120
  %v251 = vsel %vm250, %v249, 0
  %253 = vmatprep.subr.mxu0 0.0
  %254 = vmatpush1.msra.mxu0 %v201
  %255 = vmatprep.subr.mxu0 0.0
  %256 = vmatpush1.msra.mxu0 %v202
  %257 = vmatprep.subr.mxu0 0.0
  %258 = vmatpush1.msra.mxu0 %v203
  %259 = vmatprep.subr.mxu0 0.0
  %260 = vmatpush1.msra.mxu0 %v204
  %261 = vmatprep.subr.mxu0 0.0
  %262 = vmatpush1.msra.mxu0 0.0
  %263 = vmatprep.subr.mxu0 0.0
  %264 = vmatpush1.msra.mxu0 0.0
  %265 = vmatprep.subr.mxu0 0.0
  %266 = vmatpush1.msra.mxu0 0.0
  %267 = vmatprep.subr.mxu0 0.0
  %268 = vmatpush1.msra.mxu0 0.0
  %269 = vmatprep.subr.mxu0 0.0
  %270 = vmatpush1.msra.mxu0 0.0
  %271 = vmatprep.subr.mxu0 0.0
  %272 = vmatpush1.msra.mxu0 0.0
  %273 = vmatprep.subr.mxu0 0.0
  %274 = vmatpush1.msra.mxu0 0.0
  %275 = vmatprep.subr.mxu0 0.0
  %276 = vmatpush1.msra.mxu0 0.0
  %277 = vmatprep.subr.mxu0 0.0
  %278 = vmatpush1.msra.mxu0 0.0
  %279 = vmatprep.subr.mxu0 0.0
  %280 = vmatpush1.msra.mxu0 0.0
  %281 = vmatprep.subr.mxu0 0.0
  %282 = vmatpush1.msra.mxu0 0.0
  %283 = vmatprep.subr.mxu0 0.0
  %284 = vmatpush1.msra.mxu0 0.0
  %285 = vmatprep.subr.mxu0 0.0
  %286 = vmatpush1.msra.mxu0 0.0
  %287 = vmatprep.subr.mxu0 0.0
  %288 = vmatpush1.msra.mxu0 0.0
  %289 = vmatprep.subr.mxu0 0.0
  %290 = vmatpush1.msra.mxu0 0.0
  %291 = vmatprep.subr.mxu0 0.0
  %292 = vmatpush1.msra.mxu0 0.0
  %293 = vmatprep.subr.mxu0 0.0
  %294 = vmatpush1.msra.mxu0 0.0
  %295 = vmatprep.subr.mxu0 0.0
  %296 = vmatpush1.msra.mxu0 0.0
  %297 = vmatprep.subr.mxu0 0.0
  %298 = vmatpush1.msra.mxu0 0.0
  %299 = vmatprep.subr.mxu0 0.0
  %300 = vmatpush1.msra.mxu0 0.0
  %301 = vmatprep.subr.mxu0 0.0
  %302 = vmatpush1.msra.mxu0 0.0
  %303 = vmatprep.subr.mxu0 0.0
  %304 = vmatpush1.msra.mxu0 0.0
  %305 = vmatprep.subr.mxu0 0.0
  %306 = vmatpush1.msra.mxu0 0.0
  %307 = vmatprep.subr.mxu0 0.0
  %308 = vmatpush1.msra.mxu0 0.0
  %309 = vmatprep.subr.mxu0 0.0
  %310 = vmatpush1.msra.mxu0 0.0
  %311 = vmatprep.subr.mxu0 0.0
  %312 = vmatpush1.msra.mxu0 0.0
  %313 = vmatprep.subr.mxu0 0.0
  %314 = vmatpush1.msra.mxu0 0.0
  %315 = vmatprep.subr.mxu0 0.0
  %316 = vmatpush1.msra.mxu0 0.0
  %317 = vmatprep.mubr.f32.mxu0 0.0
  %318 = vmatmul.mubr.f32.gmra.mrb[0].mxu0 %v251
  %v319 = vpop.f32.mrb[0].mxu0
  %v320 = vadd.f32 0.0, %v319
  %v321 = vpop.f32.mrb[0].mxu0
  %322 = vdwg.mxu0
  %v323 = vadd.f32 %v246, %v320
  %v325 = vsel %vm250, 0.0, 0
  %327 = vmatprep.subr.mxu0 0.0
  %328 = vmatpush1.msra.mxu0 %v209
  %329 = vmatprep.subr.mxu0 0.0
  %330 = vmatpush1.msra.mxu0 %v210
  %331 = vmatprep.subr.mxu0 0.0
  %332 = vmatpush1.msra.mxu0 %v211
  %333 = vmatprep.subr.mxu0 0.0
  %334 = vmatpush1.msra.mxu0 %v212
  %335 = vmatprep.subr.mxu0 0.0
  %336 = vmatpush1.msra.mxu0 0.0
  %337 = vmatprep.subr.mxu0 0.0
  %338 = vmatpush1.msra.mxu0 0.0
  %339 = vmatprep.subr.mxu0 0.0
  %340 = vmatpush1.msra.mxu0 0.0
  %341 = vmatprep.subr.mxu0 0.0
  %342 = vmatpush1.msra.mxu0 0.0
  %343 = vmatprep.subr.mxu0 0.0
  %344 = vmatpush1.msra.mxu0 0.0
  %345 = vmatprep.subr.mxu0 0.0
  %346 = vmatpush1.msra.mxu0 0.0
  %347 = vmatprep.subr.mxu0 0.0
  %348 = vmatpush1.msra.mxu0 0.0
  %349 = vmatprep.subr.mxu0 0.0
  %350 = vmatpush1.msra.mxu0 0.0
  %351 = vmatprep.subr.mxu0 0.0
  %352 = vmatpush1.msra.mxu0 0.0
  %353 = vmatprep.subr.mxu0 0.0
  %354 = vmatpush1.msra.mxu0 0.0
  %355 = vmatprep.subr.mxu0 0.0
  %356 = vmatpush1.msra.mxu0 0.0
  %357 = vmatprep.subr.mxu0 0.0
  %358 = vmatpush1.msra.mxu0 0.0
  %359 = vmatprep.subr.mxu0 0.0
  %360 = vmatpush1.msra.mxu0 0.0
  %361 = vmatprep.subr.mxu0 0.0
  %362 = vmatpush1.msra.mxu0 0.0
  %363 = vmatprep.subr.mxu0 0.0
  %364 = vmatpush1.msra.mxu0 0.0
  %365 = vmatprep.subr.mxu0 0.0
  %366 = vmatpush1.msra.mxu0 0.0
  %367 = vmatprep.subr.mxu0 0.0
  %368 = vmatpush1.msra.mxu0 0.0
  %369 = vmatprep.subr.mxu0 0.0
  %370 = vmatpush1.msra.mxu0 0.0
  %371 = vmatprep.subr.mxu0 0.0
  %372 = vmatpush1.msra.mxu0 0.0
  %373 = vmatprep.subr.mxu0 0.0
  %374 = vmatpush1.msra.mxu0 0.0
  %375 = vmatprep.subr.mxu0 0.0
  %376 = vmatpush1.msra.mxu0 0.0
  %377 = vmatprep.subr.mxu0 0.0
  %378 = vmatpush1.msra.mxu0 0.0
  %379 = vmatprep.subr.mxu0 0.0
  %380 = vmatpush1.msra.mxu0 0.0
  %381 = vmatprep.subr.mxu0 0.0
  %382 = vmatpush1.msra.mxu0 0.0
  %383 = vmatprep.subr.mxu0 0.0
  %384 = vmatpush1.msra.mxu0 0.0
  %385 = vmatprep.subr.mxu0 0.0
  %386 = vmatpush1.msra.mxu0 0.0
  %387 = vmatprep.subr.mxu0 0.0
  %388 = vmatpush1.msra.mxu0 0.0
  %389 = vmatprep.subr.mxu0 0.0
  %390 = vmatpush1.msra.mxu0 0.0
  %391 = vmatprep.mubr.f32.mxu0 0.0
  %392 = vmatmul.mubr.f32.gmra.mrb[0].mxu0 %v325
  %v393 = vpop.f32.mrb[0].mxu0
  %v394 = vadd.f32 0.0, %v393
  %v395 = vpop.f32.mrb[0].mxu0
  %396 = vdwg.mxu0
  %397 = vmatprep.subr.mxu0 0.0
  %398 = vmatpush1.msra.mxu0 %v205
  %399 = vmatprep.subr.mxu0 0.0
  %400 = vmatpush1.msra.mxu0 %v206
  %401 = vmatprep.subr.mxu0 0.0
  %402 = vmatpush1.msra.mxu0 %v207
  %403 = vmatprep.subr.mxu0 0.0
  %404 = vmatpush1.msra.mxu0 %v208
  %405 = vmatprep.subr.mxu0 0.0
  %406 = vmatpush1.msra.mxu0 0.0
  %407 = vmatprep.subr.mxu0 0.0
  %408 = vmatpush1.msra.mxu0 0.0
  %409 = vmatprep.subr.mxu0 0.0
  %410 = vmatpush1.msra.mxu0 0.0
  %411 = vmatprep.subr.mxu0 0.0
  %412 = vmatpush1.msra.mxu0 0.0
  %413 = vmatprep.subr.mxu0 0.0
  %414 = vmatpush1.msra.mxu0 0.0
  %415 = vmatprep.subr.mxu0 0.0
  %416 = vmatpush1.msra.mxu0 0.0
  %417 = vmatprep.subr.mxu0 0.0
  %418 = vmatpush1.msra.mxu0 0.0
  %419 = vmatprep.subr.mxu0 0.0
  %420 = vmatpush1.msra.mxu0 0.0
  %421 = vmatprep.subr.mxu0 0.0
  %422 = vmatpush1.msra.mxu0 0.0
  %423 = vmatprep.subr.mxu0 0.0
  %424 = vmatpush1.msra.mxu0 0.0
  %425 = vmatprep.subr.mxu0 0.0
  %426 = vmatpush1.msra.mxu0 0.0
  %427 = vmatprep.subr.mxu0 0.0
  %428 = vmatpush1.msra.mxu0 0.0
  %429 = vmatprep.subr.mxu0 0.0
  %430 = vmatpush1.msra.mxu0 0.0
  %431 = vmatprep.subr.mxu0 0.0
  %432 = vmatpush1.msra.mxu0 0.0
  %433 = vmatprep.subr.mxu0 0.0
  %434 = vmatpush1.msra.mxu0 0.0
  %435 = vmatprep.subr.mxu0 0.0
  %436 = vmatpush1.msra.mxu0 0.0
  %437 = vmatprep.subr.mxu0 0.0
  %438 = vmatpush1.msra.mxu0 0.0
  %439 = vmatprep.subr.mxu0 0.0
  %440 = vmatpush1.msra.mxu0 0.0
  %441 = vmatprep.subr.mxu0 0.0
  %442 = vmatpush1.msra.mxu0 0.0
  %443 = vmatprep.subr.mxu0 0.0
  %444 = vmatpush1.msra.mxu0 0.0
  %445 = vmatprep.subr.mxu0 0.0
  %446 = vmatpush1.msra.mxu0 0.0
  %447 = vmatprep.subr.mxu0 0.0
  %448 = vmatpush1.msra.mxu0 0.0
  %449 = vmatprep.subr.mxu0 0.0
  %450 = vmatpush1.msra.mxu0 0.0
  %451 = vmatprep.subr.mxu0 0.0
  %452 = vmatpush1.msra.mxu0 0.0
  %453 = vmatprep.subr.mxu0 0.0
  %454 = vmatpush1.msra.mxu0 0.0
  %455 = vmatprep.subr.mxu0 0.0
  %456 = vmatpush1.msra.mxu0 0.0
  %457 = vmatprep.subr.mxu0 0.0
  %458 = vmatpush1.msra.mxu0 0.0
  %459 = vmatprep.subr.mxu0 0.0
  %460 = vmatpush1.msra.mxu0 0.0
  %461 = vmatprep.mubr.f32.mxu0 0.0
  %462 = vmatmul.mubr.f32.gmra.mrb[0].mxu0 %v251
  %v463 = vpop.f32.mrb[0].mxu0
  %v464 = vadd.f32 %v394, %v463
  %v465 = vpop.f32.mrb[0].mxu0
  %466 = vdwg.mxu0
  %v467 = vadd.f32 %v464, %v218
  %v468 = vxor.u32 %v323, 2147483648
  %v469 = vmul.f32 %v468, 1.442695
  %v470 = vpow.pop %v469
  %v471 = vadd.f32 %v470, 1.0
  %v472 = vrcp.pop %v471
  %v473 = vmul.f32 1.0, %v472
  %v474 = vtanh.pop %v323
  %v475 = vmul.f32 %v473, %v238
  %477 = vrot.lane.b32.xlu0 %v474, 32
  %v478 = vpop.permute.xlu0 %477
  %v480 = vmul.f32 %v473, %v478
  %482 = vrot.lane.b32.xlu0 %v480, 32
  %v483 = vpop.permute.xlu0 %482
  %v485 = vadd.f32 %v475, %v483
  %v486 = vtanh.pop %v485
  %488 = vrot.lane.b32.xlu0 %v486, 32
  %v489 = vpop.permute.xlu0 %488
  %v491 = vmul.f32 %v473, %v489
  %v492 = vxor.u32 %v467, 2147483648
  %v493 = vmul.f32 %v492, 1.442695
  %v494 = vpow.pop %v493
  %v495 = vadd.f32 %v494, 1.0
  %v496 = vrcp.pop %v495
  %v497 = vmul.f32 1.0, %v496
  %v498 = vtanh.pop %v467
  %v499 = vmul.f32 %v497, 0.0
  %501 = vrot.lane.b32.xlu0 %v498, 32
  %v502 = vpop.permute.xlu0 %501
  %v504 = vmul.f32 %v497, %v502
  %506 = vrot.lane.b32.xlu0 %v504, 32
  %v507 = vpop.permute.xlu0 %506
  %v509 = vadd.f32 %v499, %v507
  %v510 = vtanh.pop %v509
  %512 = vrot.lane.b32.xlu0 %v510, 32
  %v513 = vpop.permute.xlu0 %512
  %v515 = vmul.f32 %v497, %v513
  %s516 = scalar_lea.vmem [#allocation2], 16
  %v517 = vld [vmem:[%s516] sm:$0xff]
  %519 = vrot.lane.b32.xlu0 %v491, 64
  %v520 = vpop.permute.xlu0 %519
  %v521 = vsel %vm250, %v520, 0
  %523 = vmatprep.subr.mxu0 0.0
  %524 = vmatpush1.msra.mxu0 %v201
  %525 = vmatprep.subr.mxu0 0.0
  %526 = vmatpush1.msra.mxu0 %v202
  %527 = vmatprep.subr.mxu0 0.0
  %528 = vmatpush1.msra.mxu0 %v203
  %529 = vmatprep.subr.mxu0 0.0
  %530 = vmatpush1.msra.mxu0 %v204
  %531 = vmatprep.subr.mxu0 0.0
  %532 = vmatpush1.msra.mxu0 0.0
  %533 = vmatprep.subr.mxu0 0.0
  %534 = vmatpush1.msra.mxu0 0.0
  %535 = vmatprep.subr.mxu0 0.0
  %536 = vmatpush1.msra.mxu0 0.0
  %537 = vmatprep.subr.mxu0 0.0
  %538 = vmatpush1.msra.mxu0 0.0
  %539 = vmatprep.subr.mxu0 0.0
  %540 = vmatpush1.msra.mxu0 0.0
  %541 = vmatprep.subr.mxu0 0.0
  %542 = vmatpush1.msra.mxu0 0.0
  %543 = vmatprep.subr.mxu0 0.0
  %544 = vmatpush1.msra.mxu0 0.0
  %545 = vmatprep.subr.mxu0 0.0
  %546 = vmatpush1.msra.mxu0 0.0
  %547 = vmatprep.subr.mxu0 0.0
  %548 = vmatpush1.msra.mxu0 0.0
  %549 = vmatprep.subr.mxu0 0.0
  %550 = vmatpush1.msra.mxu0 0.0
  %551 = vmatprep.subr.mxu0 0.0
  %552 = vmatpush1.msra.mxu0 0.0
  %553 = vmatprep.subr.mxu0 0.0
  %554 = vmatpush1.msra.mxu0 0.0
  %555 = vmatprep.subr.mxu0 0.0
  %556 = vmatpush1.msra.mxu0 0.0
  %557 = vmatprep.subr.mxu0 0.0
  %558 = vmatpush1.msra.mxu0 0.0
  %559 = vmatprep.subr.mxu0 0.0
  %560 = vmatpush1.msra.mxu0 0.0
  %561 = vmatprep.subr.mxu0 0.0
  %562 = vmatpush1.msra.mxu0 0.0
  %563 = vmatprep.subr.mxu0 0.0
  %564 = vmatpush1.msra.mxu0 0.0
  %565 = vmatprep.subr.mxu0 0.0
  %566 = vmatpush1.msra.mxu0 0.0
  %567 = vmatprep.subr.mxu0 0.0
  %568 = vmatpush1.msra.mxu0 0.0
  %569 = vmatprep.subr.mxu0 0.0
  %570 = vmatpush1.msra.mxu0 0.0
  %571 = vmatprep.subr.mxu0 0.0
  %572 = vmatpush1.msra.mxu0 0.0
  %573 = vmatprep.subr.mxu0 0.0
  %574 = vmatpush1.msra.mxu0 0.0
  %575 = vmatprep.subr.mxu0 0.0
  %576 = vmatpush1.msra.mxu0 0.0
  %577 = vmatprep.subr.mxu0 0.0
  %578 = vmatpush1.msra.mxu0 0.0
  %579 = vmatprep.subr.mxu0 0.0
  %580 = vmatpush1.msra.mxu0 0.0
  %581 = vmatprep.subr.mxu0 0.0
  %582 = vmatpush1.msra.mxu0 0.0
  %583 = vmatprep.subr.mxu0 0.0
  %584 = vmatpush1.msra.mxu0 0.0
  %585 = vmatprep.subr.mxu0 0.0
  %586 = vmatpush1.msra.mxu0 0.0
  %587 = vmatprep.mubr.f32.mxu0 0.0
  %588 = vmatmul.mubr.f32.gmra.mrb[0].mxu0 %v521
  %v589 = vpop.f32.mrb[0].mxu0
  %v590 = vadd.f32 0.0, %v589
  %v591 = vpop.f32.mrb[0].mxu0
  %592 = vdwg.mxu0
  %v593 = vadd.f32 %v517, %v590
  %595 = vrot.lane.b32.xlu0 %v515, 64
  %v596 = vpop.permute.xlu0 %595
  %v597 = vsel %vm250, %v596, 0
  %599 = vmatprep.subr.mxu0 0.0
  %600 = vmatpush1.msra.mxu0 %v209
  %601 = vmatprep.subr.mxu0 0.0
  %602 = vmatpush1.msra.mxu0 %v210
  %603 = vmatprep.subr.mxu0 0.0
  %604 = vmatpush1.msra.mxu0 %v211
  %605 = vmatprep.subr.mxu0 0.0
  %606 = vmatpush1.msra.mxu0 %v212
  %607 = vmatprep.subr.mxu0 0.0
  %608 = vmatpush1.msra.mxu0 0.0
  %609 = vmatprep.subr.mxu0 0.0
  %610 = vmatpush1.msra.mxu0 0.0
  %611 = vmatprep.subr.mxu0 0.0
  %612 = vmatpush1.msra.mxu0 0.0
  %613 = vmatprep.subr.mxu0 0.0
  %614 = vmatpush1.msra.mxu0 0.0
  %615 = vmatprep.subr.mxu0 0.0
  %616 = vmatpush1.msra.mxu0 0.0
  %617 = vmatprep.subr.mxu0 0.0
  %618 = vmatpush1.msra.mxu0 0.0
  %619 = vmatprep.subr.mxu0 0.0
  %620 = vmatpush1.msra.mxu0 0.0
  %621 = vmatprep.subr.mxu0 0.0
  %622 = vmatpush1.msra.mxu0 0.0
  %623 = vmatprep.subr.mxu0 0.0
  %624 = vmatpush1.msra.mxu0 0.0
  %625 = vmatprep.subr.mxu0 0.0
  %626 = vmatpush1.msra.mxu0 0.0
  %627 = vmatprep.subr.mxu0 0.0
  %628 = vmatpush1.msra.mxu0 0.0
  %629 = vmatprep.subr.mxu0 0.0
  %630 = vmatpush1.msra.mxu0 0.0
  %631 = vmatprep.subr.mxu0 0.0
  %632 = vmatpush1.msra.mxu0 0.0
  %633 = vmatprep.subr.mxu0 0.0
  %634 = vmatpush1.msra.mxu0 0.0
  %635 = vmatprep.subr.mxu0 0.0
  %636 = vmatpush1.msra.mxu0 0.0
  %637 = vmatprep.subr.mxu0 0.0
  %638 = vmatpush1.msra.mxu0 0.0
  %639 = vmatprep.subr.mxu0 0.0
  %640 = vmatpush1.msra.mxu0 0.0
  %641 = vmatprep.subr.mxu0 0.0
  %642 = vmatpush1.msra.mxu0 0.0
  %643 = vmatprep.subr.mxu0 0.0
  %644 = vmatpush1.msra.mxu0 0.0
  %645 = vmatprep.subr.mxu0 0.0
  %646 = vmatpush1.msra.mxu0 0.0
  %647 = vmatprep.subr.mxu0 0.0
  %648 = vmatpush1.msra.mxu0 0.0
  %649 = vmatprep.subr.mxu0 0.0
  %650 = vmatpush1.msra.mxu0 0.0
  %651 = vmatprep.subr.mxu0 0.0
  %652 = vmatpush1.msra.mxu0 0.0
  %653 = vmatprep.subr.mxu0 0.0
  %654 = vmatpush1.msra.mxu0 0.0
  %655 = vmatprep.subr.mxu0 0.0
  %656 = vmatpush1.msra.mxu0 0.0
  %657 = vmatprep.subr.mxu0 0.0
  %658 = vmatpush1.msra.mxu0 0.0
  %659 = vmatprep.subr.mxu0 0.0
  %660 = vmatpush1.msra.mxu0 0.0
  %661 = vmatprep.subr.mxu0 0.0
  %662 = vmatpush1.msra.mxu0 0.0
  %663 = vmatprep.mubr.f32.mxu0 0.0
  %664 = vmatmul.mubr.f32.gmra.mrb[0].mxu0 %v597
  %v665 = vpop.f32.mrb[0].mxu0
  %v666 = vadd.f32 0.0, %v665
  %v667 = vpop.f32.mrb[0].mxu0
  %668 = vdwg.mxu0
  %669 = vmatprep.subr.mxu0 0.0
  %670 = vmatpush1.msra.mxu0 %v205
  %671 = vmatprep.subr.mxu0 0.0
  %672 = vmatpush1.msra.mxu0 %v206
  %673 = vmatprep.subr.mxu0 0.0
  %674 = vmatpush1.msra.mxu0 %v207
  %675 = vmatprep.subr.mxu0 0.0
  %676 = vmatpush1.msra.mxu0 %v208
  %677 = vmatprep.subr.mxu0 0.0
  %678 = vmatpush1.msra.mxu0 0.0
  %679 = vmatprep.subr.mxu0 0.0
  %680 = vmatpush1.msra.mxu0 0.0
  %681 = vmatprep.subr.mxu0 0.0
  %682 = vmatpush1.msra.mxu0 0.0
  %683 = vmatprep.subr.mxu0 0.0
  %684 = vmatpush1.msra.mxu0 0.0
  %685 = vmatprep.subr.mxu0 0.0
  %686 = vmatpush1.msra.mxu0 0.0
  %687 = vmatprep.subr.mxu0 0.0
  %688 = vmatpush1.msra.mxu0 0.0
  %689 = vmatprep.subr.mxu0 0.0
  %690 = vmatpush1.msra.mxu0 0.0
  %691 = vmatprep.subr.mxu0 0.0
  %692 = vmatpush1.msra.mxu0 0.0
  %693 = vmatprep.subr.mxu0 0.0
  %694 = vmatpush1.msra.mxu0 0.0
  %695 = vmatprep.subr.mxu0 0.0
  %696 = vmatpush1.msra.mxu0 0.0
  %697 = vmatprep.subr.mxu0 0.0
  %698 = vmatpush1.msra.mxu0 0.0
  %699 = vmatprep.subr.mxu0 0.0
  %700 = vmatpush1.msra.mxu0 0.0
  %701 = vmatprep.subr.mxu0 0.0
  %702 = vmatpush1.msra.mxu0 0.0
  %703 = vmatprep.subr.mxu0 0.0
  %704 = vmatpush1.msra.mxu0 0.0
  %705 = vmatprep.subr.mxu0 0.0
  %706 = vmatpush1.msra.mxu0 0.0
  %707 = vmatprep.subr.mxu0 0.0
  %708 = vmatpush1.msra.mxu0 0.0
  %709 = vmatprep.subr.mxu0 0.0
  %710 = vmatpush1.msra.mxu0 0.0
  %711 = vmatprep.subr.mxu0 0.0
  %712 = vmatpush1.msra.mxu0 0.0
  %713 = vmatprep.subr.mxu0 0.0
  %714 = vmatpush1.msra.mxu0 0.0
  %715 = vmatprep.subr.mxu0 0.0
  %716 = vmatpush1.msra.mxu0 0.0
  %717 = vmatprep.subr.mxu0 0.0
  %718 = vmatpush1.msra.mxu0 0.0
  %719 = vmatprep.subr.mxu0 0.0
  %720 = vmatpush1.msra.mxu0 0.0
  %721 = vmatprep.subr.mxu0 0.0
  %722 = vmatpush1.msra.mxu0 0.0
  %723 = vmatprep.subr.mxu0 0.0
  %724 = vmatpush1.msra.mxu0 0.0
  %725 = vmatprep.subr.mxu0 0.0
  %726 = vmatpush1.msra.mxu0 0.0
  %727 = vmatprep.subr.mxu0 0.0
  %728 = vmatpush1.msra.mxu0 0.0
  %729 = vmatprep.subr.mxu0 0.0
  %730 = vmatpush1.msra.mxu0 0.0
  %731 = vmatprep.subr.mxu0 0.0
  %732 = vmatpush1.msra.mxu0 0.0
  %733 = vmatprep.mubr.f32.mxu0 0.0
  %734 = vmatmul.mubr.f32.gmra.mrb[0].mxu0 %v521
  %v735 = vpop.f32.mrb[0].mxu0
  %v736 = vadd.f32 %v666, %v735
  %v737 = vpop.f32.mrb[0].mxu0
  %738 = vdwg.mxu0
  %v739 = vadd.f32 %v736, %v218
  %v740 = vxor.u32 %v593, 2147483648
  %v741 = vmul.f32 %v740, 1.442695
  %v742 = vpow.pop %v741
  %v743 = vadd.f32 %v742, 1.0
  %v744 = vrcp.pop %v743
  %v745 = vmul.f32 1.0, %v744
  %v746 = vtanh.pop %v593
  %v747 = vmul.f32 %v745, %v485
  %749 = vrot.lane.b32.xlu0 %v746, 32
  %v750 = vpop.permute.xlu0 %749
  %v752 = vmul.f32 %v745, %v750
  %754 = vrot.lane.b32.xlu0 %v752, 32
  %v755 = vpop.permute.xlu0 %754
  %v757 = vadd.f32 %v747, %v755
  %v758 = vtanh.pop %v757
  %760 = vrot.lane.b32.xlu0 %v758, 32
  %v761 = vpop.permute.xlu0 %760
  %v763 = vmul.f32 %v745, %v761
  %v764 = vxor.u32 %v739, 2147483648
  %v765 = vmul.f32 %v764, 1.442695
  %v766 = vpow.pop %v765
  %v767 = vadd.f32 %v766, 1.0
  %v768 = vrcp.pop %v767
  %v769 = vmul.f32 1.0, %v768
  %v770 = vtanh.pop %v739
  %v771 = vmul.f32 %v769, %v509
  %773 = vrot.lane.b32.xlu0 %v770, 32
  %v774 = vpop.permute.xlu0 %773
  %v776 = vmul.f32 %v769, %v774
  %778 = vrot.lane.b32.xlu0 %v776, 32
  %v779 = vpop.permute.xlu0 %778
  %v781 = vadd.f32 %v771, %v779
  %v782 = vtanh.pop %v781
  %784 = vrot.lane.b32.xlu0 %v782, 32
  %v785 = vpop.permute.xlu0 %784
  %v787 = vmul.f32 %v769, %v785
  %s788 = scalar_lea.vmem [#allocation2], 24
  %v789 = vld [vmem:[%s788] sm:$0xff]
  %791 = vrot.lane.b32.xlu0 %v763, 64
  %v792 = vpop.permute.xlu0 %791
  %v793 = vsel %vm250, %v792, 0
  %795 = vmatprep.subr.mxu0 0.0
  %796 = vmatpush1.msra.mxu0 %v201
  %797 = vmatprep.subr.mxu0 0.0
  %798 = vmatpush1.msra.mxu0 %v202
  %799 = vmatprep.subr.mxu0 0.0
  %800 = vmatpush1.msra.mxu0 %v203
  %801 = vmatprep.subr.mxu0 0.0
  %802 = vmatpush1.msra.mxu0 %v204
  %803 = vmatprep.subr.mxu0 0.0
  %804 = vmatpush1.msra.mxu0 0.0
  %805 = vmatprep.subr.mxu0 0.0
  %806 = vmatpush1.msra.mxu0 0.0
  %807 = vmatprep.subr.mxu0 0.0
  %808 = vmatpush1.msra.mxu0 0.0
  %809 = vmatprep.subr.mxu0 0.0
  %810 = vmatpush1.msra.mxu0 0.0
  %811 = vmatprep.subr.mxu0 0.0
  %812 = vmatpush1.msra.mxu0 0.0
  %813 = vmatprep.subr.mxu0 0.0
  %814 = vmatpush1.msra.mxu0 0.0
  %815 = vmatprep.subr.mxu0 0.0
  %816 = vmatpush1.msra.mxu0 0.0
  %817 = vmatprep.subr.mxu0 0.0
  %818 = vmatpush1.msra.mxu0 0.0
  %819 = vmatprep.subr.mxu0 0.0
  %820 = vmatpush1.msra.mxu0 0.0
  %821 = vmatprep.subr.mxu0 0.0
  %822 = vmatpush1.msra.mxu0 0.0
  %823 = vmatprep.subr.mxu0 0.0
  %824 = vmatpush1.msra.mxu0 0.0
  %825 = vmatprep.subr.mxu0 0.0
  %826 = vmatpush1.msra.mxu0 0.0
  %827 = vmatprep.subr.mxu0 0.0
  %828 = vmatpush1.msra.mxu0 0.0
  %829 = vmatprep.subr.mxu0 0.0
  %830 = vmatpush1.msra.mxu0 0.0
  %831 = vmatprep.subr.mxu0 0.0
  %832 = vmatpush1.msra.mxu0 0.0
  %833 = vmatprep.subr.mxu0 0.0
  %834 = vmatpush1.msra.mxu0 0.0
  %835 = vmatprep.subr.mxu0 0.0
  %836 = vmatpush1.msra.mxu0 0.0
  %837 = vmatprep.subr.mxu0 0.0
  %838 = vmatpush1.msra.mxu0 0.0
  %839 = vmatprep.subr.mxu0 0.0
  %840 = vmatpush1.msra.mxu0 0.0
  %841 = vmatprep.subr.mxu0 0.0
  %842 = vmatpush1.msra.mxu0 0.0
  %843 = vmatprep.subr.mxu0 0.0
  %844 = vmatpush1.msra.mxu0 0.0
  %845 = vmatprep.subr.mxu0 0.0
  %846 = vmatpush1.msra.mxu0 0.0
  %847 = vmatprep.subr.mxu0 0.0
  %848 = vmatpush1.msra.mxu0 0.0
  %849 = vmatprep.subr.mxu0 0.0
  %850 = vmatpush1.msra.mxu0 0.0
  %851 = vmatprep.subr.mxu0 0.0
  %852 = vmatpush1.msra.mxu0 0.0
  %853 = vmatprep.subr.mxu0 0.0
  %854 = vmatpush1.msra.mxu0 0.0
  %855 = vmatprep.subr.mxu0 0.0
  %856 = vmatpush1.msra.mxu0 0.0
  %857 = vmatprep.subr.mxu0 0.0
  %858 = vmatpush1.msra.mxu0 0.0
  %859 = vmatprep.mubr.f32.mxu0 0.0
  %860 = vmatmul.mubr.f32.gmra.mrb[0].mxu0 %v793
  %v861 = vpop.f32.mrb[0].mxu0
  %v862 = vadd.f32 0.0, %v861
  %v863 = vpop.f32.mrb[0].mxu0
  %864 = vdwg.mxu0
  %v865 = vadd.f32 %v789, %v862
  %867 = vrot.lane.b32.xlu0 %v787, 64
  %v868 = vpop.permute.xlu0 %867
  %v869 = vsel %vm250, %v868, 0
  %871 = vmatprep.subr.mxu0 0.0
  %872 = vmatpush1.msra.mxu0 %v209
  %873 = vmatprep.subr.mxu0 0.0
  %874 = vmatpush1.msra.mxu0 %v210
  %875 = vmatprep.subr.mxu0 0.0
  %876 = vmatpush1.msra.mxu0 %v211
  %877 = vmatprep.subr.mxu0 0.0
  %878 = vmatpush1.msra.mxu0 %v212
  %879 = vmatprep.subr.mxu0 0.0
  %880 = vmatpush1.msra.mxu0 0.0
  %881 = vmatprep.subr.mxu0 0.0
  %882 = vmatpush1.msra.mxu0 0.0
  %883 = vmatprep.subr.mxu0 0.0
  %884 = vmatpush1.msra.mxu0 0.0
  %885 = vmatprep.subr.mxu0 0.0
  %886 = vmatpush1.msra.mxu0 0.0
  %887 = vmatprep.subr.mxu0 0.0
  %888 = vmatpush1.msra.mxu0 0.0
  %889 = vmatprep.subr.mxu0 0.0
  %890 = vmatpush1.msra.mxu0 0.0
  %891 = vmatprep.subr.mxu0 0.0
  %892 = vmatpush1.msra.mxu0 0.0
  %893 = vmatprep.subr.mxu0 0.0
  %894 = vmatpush1.msra.mxu0 0.0
  %895 = vmatprep.subr.mxu0 0.0
  %896 = vmatpush1.msra.mxu0 0.0
  %897 = vmatprep.subr.mxu0 0.0
  %898 = vmatpush1.msra.mxu0 0.0
  %899 = vmatprep.subr.mxu0 0.0
  %900 = vmatpush1.msra.mxu0 0.0
  %901 = vmatprep.subr.mxu0 0.0
  %902 = vmatpush1.msra.mxu0 0.0
  %903 = vmatprep.subr.mxu0 0.0
  %904 = vmatpush1.msra.mxu0 0.0
  %905 = vmatprep.subr.mxu0 0.0
  %906 = vmatpush1.msra.mxu0 0.0
  %907 = vmatprep.subr.mxu0 0.0
  %908 = vmatpush1.msra.mxu0 0.0
  %909 = vmatprep.subr.mxu0 0.0
  %910 = vmatpush1.msra.mxu0 0.0
  %911 = vmatprep.subr.mxu0 0.0
  %912 = vmatpush1.msra.mxu0 0.0
  %913 = vmatprep.subr.mxu0 0.0
  %914 = vmatpush1.msra.mxu0 0.0
  %915 = vmatprep.subr.mxu0 0.0
  %916 = vmatpush1.msra.mxu0 0.0
  %917 = vmatprep.subr.mxu0 0.0
  %918 = vmatpush1.msra.mxu0 0.0
  %919 = vmatprep.subr.mxu0 0.0
  %920 = vmatpush1.msra.mxu0 0.0
  %921 = vmatprep.subr.mxu0 0.0
  %922 = vmatpush1.msra.mxu0 0.0
  %923 = vmatprep.subr.mxu0 0.0
  %924 = vmatpush1.msra.mxu0 0.0
  %925 = vmatprep.subr.mxu0 0.0
  %926 = vmatpush1.msra.mxu0 0.0
  %927 = vmatprep.subr.mxu0 0.0
  %928 = vmatpush1.msra.mxu0 0.0
  %929 = vmatprep.subr.mxu0 0.0
  %930 = vmatpush1.msra.mxu0 0.0
  %931 = vmatprep.subr.mxu0 0.0
  %932 = vmatpush1.msra.mxu0 0.0
  %933 = vmatprep.subr.mxu0 0.0
  %934 = vmatpush1.msra.mxu0 0.0
  %935 = vmatprep.mubr.f32.mxu0 0.0
  %936 = vmatmul.mubr.f32.gmra.mrb[0].mxu0 %v869
  %v937 = vpop.f32.mrb[0].mxu0
  %v938 = vadd.f32 0.0, %v937
  %v939 = vpop.f32.mrb[0].mxu0
  %940 = vdwg.mxu0
  %941 = vmatprep.subr.mxu0 0.0
  %942 = vmatpush1.msra.mxu0 %v205
  %943 = vmatprep.subr.mxu0 0.0
  %944 = vmatpush1.msra.mxu0 %v206
  %945 = vmatprep.subr.mxu0 0.0
  %946 = vmatpush1.msra.mxu0 %v207
  %947 = vmatprep.subr.mxu0 0.0
  %948 = vmatpush1.msra.mxu0 %v208
  %949 = vmatprep.subr.mxu0 0.0
  %950 = vmatpush1.msra.mxu0 0.0
  %951 = vmatprep.subr.mxu0 0.0
  %952 = vmatpush1.msra.mxu0 0.0
  %953 = vmatprep.subr.mxu0 0.0
  %954 = vmatpush1.msra.mxu0 0.0
  %955 = vmatprep.subr.mxu0 0.0
  %956 = vmatpush1.msra.mxu0 0.0
  %957 = vmatprep.subr.mxu0 0.0
  %958 = vmatpush1.msra.mxu0 0.0
  %959 = vmatprep.subr.mxu0 0.0
  %960 = vmatpush1.msra.mxu0 0.0
  %961 = vmatprep.subr.mxu0 0.0
  %962 = vmatpush1.msra.mxu0 0.0
  %963 = vmatprep.subr.mxu0 0.0
  %964 = vmatpush1.msra.mxu0 0.0
  %965 = vmatprep.subr.mxu0 0.0
  %966 = vmatpush1.msra.mxu0 0.0
  %967 = vmatprep.subr.mxu0 0.0
  %968 = vmatpush1.msra.mxu0 0.0
  %969 = vmatprep.subr.mxu0 0.0
  %970 = vmatpush1.msra.mxu0 0.0
  %971 = vmatprep.subr.mxu0 0.0
  %972 = vmatpush1.msra.mxu0 0.0
  %973 = vmatprep.subr.mxu0 0.0
  %974 = vmatpush1.msra.mxu0 0.0
  %975 = vmatprep.subr.mxu0 0.0
  %976 = vmatpush1.msra.mxu0 0.0
  %977 = vmatprep.subr.mxu0 0.0
  %978 = vmatpush1.msra.mxu0 0.0
  %979 = vmatprep.subr.mxu0 0.0
  %980 = vmatpush1.msra.mxu0 0.0
  %981 = vmatprep.subr.mxu0 0.0
  %982 = vmatpush1.msra.mxu0 0.0
  %983 = vmatprep.subr.mxu0 0.0
  %984 = vmatpush1.msra.mxu0 0.0
  %985 = vmatprep.subr.mxu0 0.0
  %986 = vmatpush1.msra.mxu0 0.0
  %987 = vmatprep.subr.mxu0 0.0
  %988 = vmatpush1.msra.mxu0 0.0
  %989 = vmatprep.subr.mxu0 0.0
  %990 = vmatpush1.msra.mxu0 0.0
  %991 = vmatprep.subr.mxu0 0.0
  %992 = vmatpush1.msra.mxu0 0.0
  %993 = vmatprep.subr.mxu0 0.0
  %994 = vmatpush1.msra.mxu0 0.0
  %995 = vmatprep.subr.mxu0 0.0
  %996 = vmatpush1.msra.mxu0 0.0
  %997 = vmatprep.subr.mxu0 0.0
  %998 = vmatpush1.msra.mxu0 0.0
  %999 = vmatprep.subr.mxu0 0.0
  %1000 = vmatpush1.msra.mxu0 0.0
  %1001 = vmatprep.subr.mxu0 0.0
  %1002 = vmatpush1.msra.mxu0 0.0
  %1003 = vmatprep.subr.mxu0 0.0
  %1004 = vmatpush1.msra.mxu0 0.0
  %1005 = vmatprep.mubr.f32.mxu0 0.0
  %1006 = vmatmul.mubr.f32.gmra.mrb[0].mxu0 %v793
  %v1007 = vpop.f32.mrb[0].mxu0
  %v1008 = vadd.f32 %v938, %v1007
  %v1009 = vpop.f32.mrb[0].mxu0
  %1010 = vdwg.mxu0
  %v1011 = vadd.f32 %v1008, %v218
  %v1012 = vxor.u32 %v865, 2147483648
  %v1013 = vmul.f32 %v1012, 1.442695
  %v1014 = vpow.pop %v1013
  %v1015 = vadd.f32 %v1014, 1.0
  %v1016 = vrcp.pop %v1015
  %v1017 = vmul.f32 1.0, %v1016
  %v1018 = vtanh.pop %v865
  %v1019 = vmul.f32 %v1017, %v757
  %1021 = vrot.lane.b32.xlu0 %v1018, 32
  %v1022 = vpop.permute.xlu0 %1021
  %v1024 = vmul.f32 %v1017, %v1022
  %1026 = vrot.lane.b32.xlu0 %v1024, 32
  %v1027 = vpop.permute.xlu0 %1026
  %v1029 = vadd.f32 %v1019, %v1027
  %v1030 = vtanh.pop %v1029
  %1032 = vrot.lane.b32.xlu0 %v1030, 32
  %v1033 = vpop.permute.xlu0 %1032
  %v1035 = vmul.f32 %v1017, %v1033
  %v1036 = vxor.u32 %v1011, 2147483648
  %v1037 = vmul.f32 %v1036, 1.442695
  %v1038 = vpow.pop %v1037
  %v1039 = vadd.f32 %v1038, 1.0
  %v1040 = vrcp.pop %v1039
  %v1041 = vmul.f32 1.0, %v1040
  %v1042 = vtanh.pop %v1011
  %v1043 = vmul.f32 %v1041, %v781
  %1045 = vrot.lane.b32.xlu0 %v1042, 32
  %v1046 = vpop.permute.xlu0 %1045
  %v1048 = vmul.f32 %v1041, %v1046
  %1050 = vrot.lane.b32.xlu0 %v1048, 32
  %v1051 = vpop.permute.xlu0 %1050
  %v1053 = vadd.f32 %v1043, %v1051
  %v1054 = vtanh.pop %v1053
  %1056 = vrot.lane.b32.xlu0 %v1054, 32
  %v1057 = vpop.permute.xlu0 %1056
  %v1059 = vmul.f32 %v1041, %v1057
  %s1060 = scalar_lea.vmem [#allocation2], 32
  %v1061 = vld [vmem:[%s1060] sm:$0xff]
  %1063 = vrot.lane.b32.xlu0 %v1035, 64
  %v1064 = vpop.permute.xlu0 %1063
  %v1065 = vsel %vm250, %v1064, 0
  %1067 = vmatprep.subr.mxu0 0.0
  %1068 = vmatpush1.msra.mxu0 %v201
  %1069 = vmatprep.subr.mxu0 0.0
  %1070 = vmatpush1.msra.mxu0 %v202
  %1071 = vmatprep.subr.mxu0 0.0
  %1072 = vmatpush1.msra.mxu0 %v203
  %1073 = vmatprep.subr.mxu0 0.0
  %1074 = vmatpush1.msra.mxu0 %v204
  %1075 = vmatprep.subr.mxu0 0.0
  %1076 = vmatpush1.msra.mxu0 0.0
  %1077 = vmatprep.subr.mxu0 0.0
  %1078 = vmatpush1.msra.mxu0 0.0
  %1079 = vmatprep.subr.mxu0 0.0
  %1080 = vmatpush1.msra.mxu0 0.0
  %1081 = vmatprep.subr.mxu0 0.0
  %1082 = vmatpush1.msra.mxu0 0.0
  %1083 = vmatprep.subr.mxu0 0.0
  %1084 = vmatpush1.msra.mxu0 0.0
  %1085 = vmatprep.subr.mxu0 0.0
  %1086 = vmatpush1.msra.mxu0 0.0
  %1087 = vmatprep.subr.mxu0 0.0
  %1088 = vmatpush1.msra.mxu0 0.0
  %1089 = vmatprep.subr.mxu0 0.0
  %1090 = vmatpush1.msra.mxu0 0.0
  %1091 = vmatprep.subr.mxu0 0.0
  %1092 = vmatpush1.msra.mxu0 0.0
  %1093 = vmatprep.subr.mxu0 0.0
  %1094 = vmatpush1.msra.mxu0 0.0
  %1095 = vmatprep.subr.mxu0 0.0
  %1096 = vmatpush1.msra.mxu0 0.0
  %1097 = vmatprep.subr.mxu0 0.0
  %1098 = vmatpush1.msra.mxu0 0.0
  %1099 = vmatprep.subr.mxu0 0.0
  %1100 = vmatpush1.msra.mxu0 0.0
  %1101 = vmatprep.subr.mxu0 0.0
  %1102 = vmatpush1.msra.mxu0 0.0
  %1103 = vmatprep.subr.mxu0 0.0
  %1104 = vmatpush1.msra.mxu0 0.0
  %1105 = vmatprep.subr.mxu0 0.0
  %1106 = vmatpush1.msra.mxu0 0.0
  %1107 = vmatprep.subr.mxu0 0.0
  %1108 = vmatpush1.msra.mxu0 0.0
  %1109 = vmatprep.subr.mxu0 0.0
  %1110 = vmatpush1.msra.mxu0 0.0
  %1111 = vmatprep.subr.mxu0 0.0
  %1112 = vmatpush1.msra.mxu0 0.0
  %1113 = vmatprep.subr.mxu0 0.0
  %1114 = vmatpush1.msra.mxu0 0.0
  %1115 = vmatprep.subr.mxu0 0.0
  %1116 = vmatpush1.msra.mxu0 0.0
  %1117 = vmatprep.subr.mxu0 0.0
  %1118 = vmatpush1.msra.mxu0 0.0
  %1119 = vmatprep.subr.mxu0 0.0
  %1120 = vmatpush1.msra.mxu0 0.0
  %1121 = vmatprep.subr.mxu0 0.0
  %1122 = vmatpush1.msra.mxu0 0.0
  %1123 = vmatprep.subr.mxu0 0.0
  %1124 = vmatpush1.msra.mxu0 0.0
  %1125 = vmatprep.subr.mxu0 0.0
  %1126 = vmatpush1.msra.mxu0 0.0
  %1127 = vmatprep.subr.mxu0 0.0
  %1128 = vmatpush1.msra.mxu0 0.0
  %1129 = vmatprep.subr.mxu0 0.0
  %1130 = vmatpush1.msra.mxu0 0.0
  %1131 = vmatprep.mubr.f32.mxu0 0.0
  %1132 = vmatmul.mubr.f32.gmra.mrb[0].mxu0 %v1065
  %v1133 = vpop.f32.mrb[0].mxu0
  %v1134 = vadd.f32 0.0, %v1133
  %v1135 = vpop.f32.mrb[0].mxu0
  %1136 = vdwg.mxu0
  %v1137 = vadd.f32 %v1061, %v1134
  %1139 = vrot.lane.b32.xlu0 %v1059, 64
  %v1140 = vpop.permute.xlu0 %1139
  %v1141 = vsel %vm250, %v1140, 0
  %1143 = vmatprep.subr.mxu0 0.0
  %1144 = vmatpush1.msra.mxu0 %v209
  %1145 = vmatprep.subr.mxu0 0.0
  %1146 = vmatpush1.msra.mxu0 %v210
  %1147 = vmatprep.subr.mxu0 0.0
  %1148 = vmatpush1.msra.mxu0 %v211
  %1149 = vmatprep.subr.mxu0 0.0
  %1150 = vmatpush1.msra.mxu0 %v212
  %1151 = vmatprep.subr.mxu0 0.0
  %1152 = vmatpush1.msra.mxu0 0.0
  %1153 = vmatprep.subr.mxu0 0.0
  %1154 = vmatpush1.msra.mxu0 0.0
  %1155 = vmatprep.subr.mxu0 0.0
  %1156 = vmatpush1.msra.mxu0 0.0
  %1157 = vmatprep.subr.mxu0 0.0
  %1158 = vmatpush1.msra.mxu0 0.0
  %1159 = vmatprep.subr.mxu0 0.0
  %1160 = vmatpush1.msra.mxu0 0.0
  %1161 = vmatprep.subr.mxu0 0.0
  %1162 = vmatpush1.msra.mxu0 0.0
  %1163 = vmatprep.subr.mxu0 0.0
  %1164 = vmatpush1.msra.mxu0 0.0
  %1165 = vmatprep.subr.mxu0 0.0
  %1166 = vmatpush1.msra.mxu0 0.0
  %1167 = vmatprep.subr.mxu0 0.0
  %1168 = vmatpush1.msra.mxu0 0.0
  %1169 = vmatprep.subr.mxu0 0.0
  %1170 = vmatpush1.msra.mxu0 0.0
  %1171 = vmatprep.subr.mxu0 0.0
  %1172 = vmatpush1.msra.mxu0 0.0
  %1173 = vmatprep.subr.mxu0 0.0
  %1174 = vmatpush1.msra.mxu0 0.0
  %1175 = vmatprep.subr.mxu0 0.0
  %1176 = vmatpush1.msra.mxu0 0.0
  %1177 = vmatprep.subr.mxu0 0.0
  %1178 = vmatpush1.msra.mxu0 0.0
  %1179 = vmatprep.subr.mxu0 0.0
  %1180 = vmatpush1.msra.mxu0 0.0
  %1181 = vmatprep.subr.mxu0 0.0
  %1182 = vmatpush1.msra.mxu0 0.0
  %1183 = vmatprep.subr.mxu0 0.0
  %1184 = vmatpush1.msra.mxu0 0.0
  %1185 = vmatprep.subr.mxu0 0.0
  %1186 = vmatpush1.msra.mxu0 0.0
  %1187 = vmatprep.subr.mxu0 0.0
  %1188 = vmatpush1.msra.mxu0 0.0
  %1189 = vmatprep.subr.mxu0 0.0
  %1190 = vmatpush1.msra.mxu0 0.0
  %1191 = vmatprep.subr.mxu0 0.0
  %1192 = vmatpush1.msra.mxu0 0.0
  %1193 = vmatprep.subr.mxu0 0.0
  %1194 = vmatpush1.msra.mxu0 0.0
  %1195 = vmatprep.subr.mxu0 0.0
  %1196 = vmatpush1.msra.mxu0 0.0
  %1197 = vmatprep.subr.mxu0 0.0
  %1198 = vmatpush1.msra.mxu0 0.0
  %1199 = vmatprep.subr.mxu0 0.0
  %1200 = vmatpush1.msra.mxu0 0.0
  %1201 = vmatprep.subr.mxu0 0.0
  %1202 = vmatpush1.msra.mxu0 0.0
  %1203 = vmatprep.subr.mxu0 0.0
  %1204 = vmatpush1.msra.mxu0 0.0
  %1205 = vmatprep.subr.mxu0 0.0
  %1206 = vmatpush1.msra.mxu0 0.0
  %1207 = vmatprep.mubr.f32.mxu0 0.0
  %1208 = vmatmul.mubr.f32.gmra.mrb[0].mxu0 %v1141
  %v1209 = vpop.f32.mrb[0].mxu0
  %v1210 = vadd.f32 0.0, %v1209
  %v1211 = vpop.f32.mrb[0].mxu0
  %1212 = vdwg.mxu0
  %1213 = vmatprep.subr.mxu0 0.0
  %1214 = vmatpush1.msra.mxu0 %v205
  %1215 = vmatprep.subr.mxu0 0.0
  %1216 = vmatpush1.msra.mxu0 %v206
  %1217 = vmatprep.subr.mxu0 0.0
  %1218 = vmatpush1.msra.mxu0 %v207
  %1219 = vmatprep.subr.mxu0 0.0
  %1220 = vmatpush1.msra.mxu0 %v208
  %1221 = vmatprep.subr.mxu0 0.0
  %1222 = vmatpush1.msra.mxu0 0.0
  %1223 = vmatprep.subr.mxu0 0.0
  %1224 = vmatpush1.msra.mxu0 0.0
  %1225 = vmatprep.subr.mxu0 0.0
  %1226 = vmatpush1.msra.mxu0 0.0
  %1227 = vmatprep.subr.mxu0 0.0
  %1228 = vmatpush1.msra.mxu0 0.0
  %1229 = vmatprep.subr.mxu0 0.0
  %1230 = vmatpush1.msra.mxu0 0.0
  %1231 = vmatprep.subr.mxu0 0.0
  %1232 = vmatpush1.msra.mxu0 0.0
  %1233 = vmatprep.subr.mxu0 0.0
  %1234 = vmatpush1.msra.mxu0 0.0
  %1235 = vmatprep.subr.mxu0 0.0
  %1236 = vmatpush1.msra.mxu0 0.0
  %1237 = vmatprep.subr.mxu0 0.0
  %1238 = vmatpush1.msra.mxu0 0.0
  %1239 = vmatprep.subr.mxu0 0.0
  %1240 = vmatpush1.msra.mxu0 0.0
  %1241 = vmatprep.subr.mxu0 0.0
  %1242 = vmatpush1.msra.mxu0 0.0
  %1243 = vmatprep.subr.mxu0 0.0
  %1244 = vmatpush1.msra.mxu0 0.0
  %1245 = vmatprep.subr.mxu0 0.0
  %1246 = vmatpush1.msra.mxu0 0.0
  %1247 = vmatprep.subr.mxu0 0.0
  %1248 = vmatpush1.msra.mxu0 0.0
  %1249 = vmatprep.subr.mxu0 0.0
  %1250 = vmatpush1.msra.mxu0 0.0
  %1251 = vmatprep.subr.mxu0 0.0
  %1252 = vmatpush1.msra.mxu0 0.0
  %1253 = vmatprep.subr.mxu0 0.0
  %1254 = vmatpush1.msra.mxu0 0.0
  %1255 = vmatprep.subr.mxu0 0.0
  %1256 = vmatpush1.msra.mxu0 0.0
  %1257 = vmatprep.subr.mxu0 0.0
  %1258 = vmatpush1.msra.mxu0 0.0
  %1259 = vmatprep.subr.mxu0 0.0
  %1260 = vmatpush1.msra.mxu0 0.0
  %1261 = vmatprep.subr.mxu0 0.0
  %1262 = vmatpush1.msra.mxu0 0.0
  %1263 = vmatprep.subr.mxu0 0.0
  %1264 = vmatpush1.msra.mxu0 0.0
  %1265 = vmatprep.subr.mxu0 0.0
  %1266 = vmatpush1.msra.mxu0 0.0
  %1267 = vmatprep.subr.mxu0 0.0
  %1268 = vmatpush1.msra.mxu0 0.0
  %1269 = vmatprep.subr.mxu0 0.0
  %1270 = vmatpush1.msra.mxu0 0.0
  %1271 = vmatprep.subr.mxu0 0.0
  %1272 = vmatpush1.msra.mxu0 0.0
  %1273 = vmatprep.subr.mxu0 0.0
  %1274 = vmatpush1.msra.mxu0 0.0
  %1275 = vmatprep.subr.mxu0 0.0
  %1276 = vmatpush1.msra.mxu0 0.0
  %1277 = vmatprep.mubr.f32.mxu0 0.0
  %1278 = vmatmul.mubr.f32.gmra.mrb[0].mxu0 %v1065
  %v1279 = vpop.f32.mrb[0].mxu0
  %v1280 = vadd.f32 %v1210, %v1279
  %v1281 = vpop.f32.mrb[0].mxu0
  %1282 = vdwg.mxu0
  %v1283 = vadd.f32 %v1280, %v218
  %v1284 = vxor.u32 %v1137, 2147483648
  %v1285 = vmul.f32 %v1284, 1.442695
  %v1286 = vpow.pop %v1285
  %v1287 = vadd.f32 %v1286, 1.0
  %v1288 = vrcp.pop %v1287
  %v1289 = vmul.f32 1.0, %v1288
  %v1290 = vtanh.pop %v1137
  %v1291 = vmul.f32 %v1289, %v1029
  %1293 = vrot.lane.b32.xlu0 %v1290, 32
  %v1294 = vpop.permute.xlu0 %1293
  %v1296 = vmul.f32 %v1289, %v1294
  %1298 = vrot.lane.b32.xlu0 %v1296, 32
  %v1299 = vpop.permute.xlu0 %1298
  %v1301 = vadd.f32 %v1291, %v1299
  %v1302 = vtanh.pop %v1301
  %1304 = vrot.lane.b32.xlu0 %v1302, 32
  %v1305 = vpop.permute.xlu0 %1304
  %v1307 = vmul.f32 %v1289, %v1305
  %v1308 = vxor.u32 %v1283, 2147483648
  %v1309 = vmul.f32 %v1308, 1.442695
  %v1310 = vpow.pop %v1309
  %v1311 = vadd.f32 %v1310, 1.0
  %v1312 = vrcp.pop %v1311
  %v1313 = vmul.f32 1.0, %v1312
  %v1314 = vtanh.pop %v1283
  %v1315 = vmul.f32 %v1313, %v1053
  %1317 = vrot.lane.b32.xlu0 %v1314, 32
  %v1318 = vpop.permute.xlu0 %1317
  %v1320 = vmul.f32 %v1313, %v1318
  %1322 = vrot.lane.b32.xlu0 %v1320, 32
  %v1323 = vpop.permute.xlu0 %1322
  %v1325 = vadd.f32 %v1315, %v1323
  %v1326 = vtanh.pop %v1325
  %1328 = vrot.lane.b32.xlu0 %v1326, 32
  %v1329 = vpop.permute.xlu0 %1328
  %v1331 = vmul.f32 %v1313, %v1329
  %s1332 = scalar_lea.vmem [#allocation2], 40
  %v1333 = vld [vmem:[%s1332] sm:$0xff]
  %1335 = vrot.lane.b32.xlu0 %v1307, 64
  %v1336 = vpop.permute.xlu0 %1335
  %v1337 = vsel %vm250, %v1336, 0
  %1339 = vmatprep.subr.mxu0 0.0
  %1340 = vmatpush1.msra.mxu0 %v201
  %1341 = vmatprep.subr.mxu0 0.0
  %1342 = vmatpush1.msra.mxu0 %v202
  %1343 = vmatprep.subr.mxu0 0.0
  %1344 = vmatpush1.msra.mxu0 %v203
  %1345 = vmatprep.subr.mxu0 0.0
  %1346 = vmatpush1.msra.mxu0 %v204
  %1347 = vmatprep.subr.mxu0 0.0
  %1348 = vmatpush1.msra.mxu0 0.0
  %1349 = vmatprep.subr.mxu0 0.0
  %1350 = vmatpush1.msra.mxu0 0.0
  %1351 = vmatprep.subr.mxu0 0.0
  %1352 = vmatpush1.msra.mxu0 0.0
  %1353 = vmatprep.subr.mxu0 0.0
  %1354 = vmatpush1.msra.mxu0 0.0
  %1355 = vmatprep.subr.mxu0 0.0
  %1356 = vmatpush1.msra.mxu0 0.0
  %1357 = vmatprep.subr.mxu0 0.0
  %1358 = vmatpush1.msra.mxu0 0.0
  %1359 = vmatprep.subr.mxu0 0.0
  %1360 = vmatpush1.msra.mxu0 0.0
  %1361 = vmatprep.subr.mxu0 0.0
  %1362 = vmatpush1.msra.mxu0 0.0
  %1363 = vmatprep.subr.mxu0 0.0
  %1364 = vmatpush1.msra.mxu0 0.0
  %1365 = vmatprep.subr.mxu0 0.0
  %1366 = vmatpush1.msra.mxu0 0.0
  %1367 = vmatprep.subr.mxu0 0.0
  %1368 = vmatpush1.msra.mxu0 0.0
  %1369 = vmatprep.subr.mxu0 0.0
  %1370 = vmatpush1.msra.mxu0 0.0
  %1371 = vmatprep.subr.mxu0 0.0
  %1372 = vmatpush1.msra.mxu0 0.0
  %1373 = vmatprep.subr.mxu0 0.0
  %1374 = vmatpush1.msra.mxu0 0.0
  %1375 = vmatprep.subr.mxu0 0.0
  %1376 = vmatpush1.msra.mxu0 0.0
  %1377 = vmatprep.subr.mxu0 0.0
  %1378 = vmatpush1.msra.mxu0 0.0
  %1379 = vmatprep.subr.mxu0 0.0
  %1380 = vmatpush1.msra.mxu0 0.0
  %1381 = vmatprep.subr.mxu0 0.0
  %1382 = vmatpush1.msra.mxu0 0.0
  %1383 = vmatprep.subr.mxu0 0.0
  %1384 = vmatpush1.msra.mxu0 0.0
  %1385 = vmatprep.subr.mxu0 0.0
  %1386 = vmatpush1.msra.mxu0 0.0
  %1387 = vmatprep.subr.mxu0 0.0
  %1388 = vmatpush1.msra.mxu0 0.0
  %1389 = vmatprep.subr.mxu0 0.0
  %1390 = vmatpush1.msra.mxu0 0.0
  %1391 = vmatprep.subr.mxu0 0.0
  %1392 = vmatpush1.msra.mxu0 0.0
  %1393 = vmatprep.subr.mxu0 0.0
  %1394 = vmatpush1.msra.mxu0 0.0
  %1395 = vmatprep.subr.mxu0 0.0
  %1396 = vmatpush1.msra.mxu0 0.0
  %1397 = vmatprep.subr.mxu0 0.0
  %1398 = vmatpush1.msra.mxu0 0.0
  %1399 = vmatprep.subr.mxu0 0.0
  %1400 = vmatpush1.msra.mxu0 0.0
  %1401 = vmatprep.subr.mxu0 0.0
  %1402 = vmatpush1.msra.mxu0 0.0
  %1403 = vmatprep.mubr.f32.mxu0 0.0
  %1404 = vmatmul.mubr.f32.gmra.mrb[0].mxu0 %v1337
  %v1405 = vpop.f32.mrb[0].mxu0
  %v1406 = vadd.f32 0.0, %v1405
  %v1407 = vpop.f32.mrb[0].mxu0
  %1408 = vdwg.mxu0
  %v1409 = vadd.f32 %v1333, %v1406
  %1411 = vrot.lane.b32.xlu0 %v1331, 64
  %v1412 = vpop.permute.xlu0 %1411
  %v1413 = vsel %vm250, %v1412, 0
  %1415 = vmatprep.subr.mxu0 0.0
  %1416 = vmatpush1.msra.mxu0 %v209
  %1417 = vmatprep.subr.mxu0 0.0
  %1418 = vmatpush1.msra.mxu0 %v210
  %1419 = vmatprep.subr.mxu0 0.0
  %1420 = vmatpush1.msra.mxu0 %v211
  %1421 = vmatprep.subr.mxu0 0.0
  %1422 = vmatpush1.msra.mxu0 %v212
  %1423 = vmatprep.subr.mxu0 0.0
  %1424 = vmatpush1.msra.mxu0 0.0
  %1425 = vmatprep.subr.mxu0 0.0
  %1426 = vmatpush1.msra.mxu0 0.0
  %1427 = vmatprep.subr.mxu0 0.0
  %1428 = vmatpush1.msra.mxu0 0.0
  %1429 = vmatprep.subr.mxu0 0.0
  %1430 = vmatpush1.msra.mxu0 0.0
  %1431 = vmatprep.subr.mxu0 0.0
  %1432 = vmatpush1.msra.mxu0 0.0
  %1433 = vmatprep.subr.mxu0 0.0
  %1434 = vmatpush1.msra.mxu0 0.0
  %1435 = vmatprep.subr.mxu0 0.0
  %1436 = vmatpush1.msra.mxu0 0.0
  %1437 = vmatprep.subr.mxu0 0.0
  %1438 = vmatpush1.msra.mxu0 0.0
  %1439 = vmatprep.subr.mxu0 0.0
  %1440 = vmatpush1.msra.mxu0 0.0
  %1441 = vmatprep.subr.mxu0 0.0
  %1442 = vmatpush1.msra.mxu0 0.0
  %1443 = vmatprep.subr.mxu0 0.0
  %1444 = vmatpush1.msra.mxu0 0.0
  %1445 = vmatprep.subr.mxu0 0.0
  %1446 = vmatpush1.msra.mxu0 0.0
  %1447 = vmatprep.subr.mxu0 0.0
  %1448 = vmatpush1.msra.mxu0 0.0
  %1449 = vmatprep.subr.mxu0 0.0
  %1450 = vmatpush1.msra.mxu0 0.0
  %1451 = vmatprep.subr.mxu0 0.0
  %1452 = vmatpush1.msra.mxu0 0.0
  %1453 = vmatprep.subr.mxu0 0.0
  %1454 = vmatpush1.msra.mxu0 0.0
  %1455 = vmatprep.subr.mxu0 0.0
  %1456 = vmatpush1.msra.mxu0 0.0
  %1457 = vmatprep.subr.mxu0 0.0
  %1458 = vmatpush1.msra.mxu0 0.0
  %1459 = vmatprep.subr.mxu0 0.0
  %1460 = vmatpush1.msra.mxu0 0.0
  %1461 = vmatprep.subr.mxu0 0.0
  %1462 = vmatpush1.msra.mxu0 0.0
  %1463 = vmatprep.subr.mxu0 0.0
  %1464 = vmatpush1.msra.mxu0 0.0
  %1465 = vmatprep.subr.mxu0 0.0
  %1466 = vmatpush1.msra.mxu0 0.0
  %1467 = vmatprep.subr.mxu0 0.0
  %1468 = vmatpush1.msra.mxu0 0.0
  %1469 = vmatprep.subr.mxu0 0.0
  %1470 = vmatpush1.msra.mxu0 0.0
  %1471 = vmatprep.subr.mxu0 0.0
  %1472 = vmatpush1.msra.mxu0 0.0
  %1473 = vmatprep.subr.mxu0 0.0
  %1474 = vmatpush1.msra.mxu0 0.0
  %1475 = vmatprep.subr.mxu0 0.0
  %1476 = vmatpush1.msra.mxu0 0.0
  %1477 = vmatprep.subr.mxu0 0.0
  %1478 = vmatpush1.msra.mxu0 0.0
  %1479 = vmatprep.mubr.f32.mxu0 0.0
  %1480 = vmatmul.mubr.f32.gmra.mrb[0].mxu0 %v1413
  %v1481 = vpop.f32.mrb[0].mxu0
  %v1482 = vadd.f32 0.0, %v1481
  %v1483 = vpop.f32.mrb[0].mxu0
  %1484 = vdwg.mxu0
  %1485 = vmatprep.subr.mxu0 0.0
  %1486 = vmatpush1.msra.mxu0 %v205
  %1487 = vmatprep.subr.mxu0 0.0
  %1488 = vmatpush1.msra.mxu0 %v206
  %1489 = vmatprep.subr.mxu0 0.0
  %1490 = vmatpush1.msra.mxu0 %v207
  %1491 = vmatprep.subr.mxu0 0.0
  %1492 = vmatpush1.msra.mxu0 %v208
  %1493 = vmatprep.subr.mxu0 0.0
  %1494 = vmatpush1.msra.mxu0 0.0
  %1495 = vmatprep.subr.mxu0 0.0
  %1496 = vmatpush1.msra.mxu0 0.0
  %1497 = vmatprep.subr.mxu0 0.0
  %1498 = vmatpush1.msra.mxu0 0.0
  %1499 = vmatprep.subr.mxu0 0.0
  %1500 = vmatpush1.msra.mxu0 0.0
  %1501 = vmatprep.subr.mxu0 0.0
  %1502 = vmatpush1.msra.mxu0 0.0
  %1503 = vmatprep.subr.mxu0 0.0
  %1504 = vmatpush1.msra.mxu0 0.0
  %1505 = vmatprep.subr.mxu0 0.0
  %1506 = vmatpush1.msra.mxu0 0.0
  %1507 = vmatprep.subr.mxu0 0.0
  %1508 = vmatpush1.msra.mxu0 0.0
  %1509 = vmatprep.subr.mxu0 0.0
  %1510 = vmatpush1.msra.mxu0 0.0
  %1511 = vmatprep.subr.mxu0 0.0
  %1512 = vmatpush1.msra.mxu0 0.0
  %1513 = vmatprep.subr.mxu0 0.0
  %1514 = vmatpush1.msra.mxu0 0.0
  %1515 = vmatprep.subr.mxu0 0.0
  %1516 = vmatpush1.msra.mxu0 0.0
  %1517 = vmatprep.subr.mxu0 0.0
  %1518 = vmatpush1.msra.mxu0 0.0
  %1519 = vmatprep.subr.mxu0 0.0
  %1520 = vmatpush1.msra.mxu0 0.0
  %1521 = vmatprep.subr.mxu0 0.0
  %1522 = vmatpush1.msra.mxu0 0.0
  %1523 = vmatprep.subr.mxu0 0.0
  %1524 = vmatpush1.msra.mxu0 0.0
  %1525 = vmatprep.subr.mxu0 0.0
  %1526 = vmatpush1.msra.mxu0 0.0
  %1527 = vmatprep.subr.mxu0 0.0
  %1528 = vmatpush1.msra.mxu0 0.0
  %1529 = vmatprep.subr.mxu0 0.0
  %1530 = vmatpush1.msra.mxu0 0.0
  %1531 = vmatprep.subr.mxu0 0.0
  %1532 = vmatpush1.msra.mxu0 0.0
  %1533 = vmatprep.subr.mxu0 0.0
  %1534 = vmatpush1.msra.mxu0 0.0
  %1535 = vmatprep.subr.mxu0 0.0
  %1536 = vmatpush1.msra.mxu0 0.0
  %1537 = vmatprep.subr.mxu0 0.0
  %1538 = vmatpush1.msra.mxu0 0.0
  %1539 = vmatprep.subr.mxu0 0.0
  %1540 = vmatpush1.msra.mxu0 0.0
  %1541 = vmatprep.subr.mxu0 0.0
  %1542 = vmatpush1.msra.mxu0 0.0
  %1543 = vmatprep.subr.mxu0 0.0
  %1544 = vmatpush1.msra.mxu0 0.0
  %1545 = vmatprep.subr.mxu0 0.0
  %1546 = vmatpush1.msra.mxu0 0.0
  %1547 = vmatprep.subr.mxu0 0.0
  %1548 = vmatpush1.msra.mxu0 0.0
  %1549 = vmatprep.mubr.f32.mxu0 0.0
  %1550 = vmatmul.mubr.f32.gmra.mrb[0].mxu0 %v1337
  %v1551 = vpop.f32.mrb[0].mxu0
  %v1552 = vadd.f32 %v1482, %v1551
  %v1553 = vpop.f32.mrb[0].mxu0
  %1554 = vdwg.mxu0
  %v1555 = vadd.f32 %v1552, %v218
  %v1556 = vxor.u32 %v1409, 2147483648
  %v1557 = vmul.f32 %v1556, 1.442695
  %v1558 = vpow.pop %v1557
  %v1559 = vadd.f32 %v1558, 1.0
  %v1560 = vrcp.pop %v1559
  %v1561 = vmul.f32 1.0, %v1560
  %v1562 = vtanh.pop %v1409
  %v1563 = vmul.f32 %v1561, %v1301
  %1565 = vrot.lane.b32.xlu0 %v1562, 32
  %v1566 = vpop.permute.xlu0 %1565
  %v1568 = vmul.f32 %v1561, %v1566
  %1570 = vrot.lane.b32.xlu0 %v1568, 32
  %v1571 = vpop.permute.xlu0 %1570
  %v1573 = vadd.f32 %v1563, %v1571
  %v1574 = vtanh.pop %v1573
  %1576 = vrot.lane.b32.xlu0 %v1574, 32
  %v1577 = vpop.permute.xlu0 %1576
  %v1579 = vmul.f32 %v1561, %v1577
  %v1580 = vxor.u32 %v1555, 2147483648
  %v1581 = vmul.f32 %v1580, 1.442695
  %v1582 = vpow.pop %v1581
  %v1583 = vadd.f32 %v1582, 1.0
  %v1584 = vrcp.pop %v1583
  %v1585 = vmul.f32 1.0, %v1584
  %v1586 = vtanh.pop %v1555
  %v1587 = vmul.f32 %v1585, %v1325
  %1589 = vrot.lane.b32.xlu0 %v1586, 32
  %v1590 = vpop.permute.xlu0 %1589
  %v1592 = vmul.f32 %v1585, %v1590
  %1594 = vrot.lane.b32.xlu0 %v1592, 32
  %v1595 = vpop.permute.xlu0 %1594
  %v1597 = vadd.f32 %v1587, %v1595
  %v1598 = vtanh.pop %v1597
  %1600 = vrot.lane.b32.xlu0 %v1598, 32
  %v1601 = vpop.permute.xlu0 %1600
  %v1603 = vmul.f32 %v1585, %v1601
  %s1604 = scalar_lea.vmem [#allocation2], 48
  %v1605 = vld [vmem:[%s1604] sm:$0xff]
  %1607 = vrot.lane.b32.xlu0 %v1579, 64
  %v1608 = vpop.permute.xlu0 %1607
  %v1609 = vsel %vm250, %v1608, 0
  %1611 = vmatprep.subr.mxu0 0.0
  %1612 = vmatpush1.msra.mxu0 %v201
  %1613 = vmatprep.subr.mxu0 0.0
  %1614 = vmatpush1.msra.mxu0 %v202
  %1615 = vmatprep.subr.mxu0 0.0
  %1616 = vmatpush1.msra.mxu0 %v203
  %1617 = vmatprep.subr.mxu0 0.0
  %1618 = vmatpush1.msra.mxu0 %v204
  %1619 = vmatprep.subr.mxu0 0.0
  %1620 = vmatpush1.msra.mxu0 0.0
  %1621 = vmatprep.subr.mxu0 0.0
  %1622 = vmatpush1.msra.mxu0 0.0
  %1623 = vmatprep.subr.mxu0 0.0
  %1624 = vmatpush1.msra.mxu0 0.0
  %1625 = vmatprep.subr.mxu0 0.0
  %1626 = vmatpush1.msra.mxu0 0.0
  %1627 = vmatprep.subr.mxu0 0.0
  %1628 = vmatpush1.msra.mxu0 0.0
  %1629 = vmatprep.subr.mxu0 0.0
  %1630 = vmatpush1.msra.mxu0 0.0
  %1631 = vmatprep.subr.mxu0 0.0
  %1632 = vmatpush1.msra.mxu0 0.0
  %1633 = vmatprep.subr.mxu0 0.0
  %1634 = vmatpush1.msra.mxu0 0.0
  %1635 = vmatprep.subr.mxu0 0.0
  %1636 = vmatpush1.msra.mxu0 0.0
  %1637 = vmatprep.subr.mxu0 0.0
  %1638 = vmatpush1.msra.mxu0 0.0
  %1639 = vmatprep.subr.mxu0 0.0
  %1640 = vmatpush1.msra.mxu0 0.0
  %1641 = vmatprep.subr.mxu0 0.0
  %1642 = vmatpush1.msra.mxu0 0.0
  %1643 = vmatprep.subr.mxu0 0.0
  %1644 = vmatpush1.msra.mxu0 0.0
  %1645 = vmatprep.subr.mxu0 0.0
  %1646 = vmatpush1.msra.mxu0 0.0
  %1647 = vmatprep.subr.mxu0 0.0
  %1648 = vmatpush1.msra.mxu0 0.0
  %1649 = vmatprep.subr.mxu0 0.0
  %1650 = vmatpush1.msra.mxu0 0.0
  %1651 = vmatprep.subr.mxu0 0.0
  %1652 = vmatpush1.msra.mxu0 0.0
  %1653 = vmatprep.subr.mxu0 0.0
  %1654 = vmatpush1.msra.mxu0 0.0
  %1655 = vmatprep.subr.mxu0 0.0
  %1656 = vmatpush1.msra.mxu0 0.0
  %1657 = vmatprep.subr.mxu0 0.0
  %1658 = vmatpush1.msra.mxu0 0.0
  %1659 = vmatprep.subr.mxu0 0.0
  %1660 = vmatpush1.msra.mxu0 0.0
  %1661 = vmatprep.subr.mxu0 0.0
  %1662 = vmatpush1.msra.mxu0 0.0
  %1663 = vmatprep.subr.mxu0 0.0
  %1664 = vmatpush1.msra.mxu0 0.0
  %1665 = vmatprep.subr.mxu0 0.0
  %1666 = vmatpush1.msra.mxu0 0.0
  %1667 = vmatprep.subr.mxu0 0.0
  %1668 = vmatpush1.msra.mxu0 0.0
  %1669 = vmatprep.subr.mxu0 0.0
  %1670 = vmatpush1.msra.mxu0 0.0
  %1671 = vmatprep.subr.mxu0 0.0
  %1672 = vmatpush1.msra.mxu0 0.0
  %1673 = vmatprep.subr.mxu0 0.0
  %1674 = vmatpush1.msra.mxu0 0.0
  %1675 = vmatprep.mubr.f32.mxu0 0.0
  %1676 = vmatmul.mubr.f32.gmra.mrb[0].mxu0 %v1609
  %v1677 = vpop.f32.mrb[0].mxu0
  %v1678 = vadd.f32 0.0, %v1677
  %v1679 = vpop.f32.mrb[0].mxu0
  %1680 = vdwg.mxu0
  %v1681 = vadd.f32 %v1605, %v1678
  %1683 = vrot.lane.b32.xlu0 %v1603, 64
  %v1684 = vpop.permute.xlu0 %1683
  %v1685 = vsel %vm250, %v1684, 0
  %1687 = vmatprep.subr.mxu0 0.0
  %1688 = vmatpush1.msra.mxu0 %v209
  %1689 = vmatprep.subr.mxu0 0.0
  %1690 = vmatpush1.msra.mxu0 %v210
  %1691 = vmatprep.subr.mxu0 0.0
  %1692 = vmatpush1.msra.mxu0 %v211
  %1693 = vmatprep.subr.mxu0 0.0
  %1694 = vmatpush1.msra.mxu0 %v212
  %1695 = vmatprep.subr.mxu0 0.0
  %1696 = vmatpush1.msra.mxu0 0.0
  %1697 = vmatprep.subr.mxu0 0.0
  %1698 = vmatpush1.msra.mxu0 0.0
  %1699 = vmatprep.subr.mxu0 0.0
  %1700 = vmatpush1.msra.mxu0 0.0
  %1701 = vmatprep.subr.mxu0 0.0
  %1702 = vmatpush1.msra.mxu0 0.0
  %1703 = vmatprep.subr.mxu0 0.0
  %1704 = vmatpush1.msra.mxu0 0.0
  %1705 = vmatprep.subr.mxu0 0.0
  %1706 = vmatpush1.msra.mxu0 0.0
  %1707 = vmatprep.subr.mxu0 0.0
  %1708 = vmatpush1.msra.mxu0 0.0
  %1709 = vmatprep.subr.mxu0 0.0
  %1710 = vmatpush1.msra.mxu0 0.0
  %1711 = vmatprep.subr.mxu0 0.0
  %1712 = vmatpush1.msra.mxu0 0.0
  %1713 = vmatprep.subr.mxu0 0.0
  %1714 = vmatpush1.msra.mxu0 0.0
  %1715 = vmatprep.subr.mxu0 0.0
  %1716 = vmatpush1.msra.mxu0 0.0
  %1717 = vmatprep.subr.mxu0 0.0
  %1718 = vmatpush1.msra.mxu0 0.0
  %1719 = vmatprep.subr.mxu0 0.0
  %1720 = vmatpush1.msra.mxu0 0.0
  %1721 = vmatprep.subr.mxu0 0.0
  %1722 = vmatpush1.msra.mxu0 0.0
  %1723 = vmatprep.subr.mxu0 0.0
  %1724 = vmatpush1.msra.mxu0 0.0
  %1725 = vmatprep.subr.mxu0 0.0
  %1726 = vmatpush1.msra.mxu0 0.0
  %1727 = vmatprep.subr.mxu0 0.0
  %1728 = vmatpush1.msra.mxu0 0.0
  %1729 = vmatprep.subr.mxu0 0.0
  %1730 = vmatpush1.msra.mxu0 0.0
  %1731 = vmatprep.subr.mxu0 0.0
  %1732 = vmatpush1.msra.mxu0 0.0
  %1733 = vmatprep.subr.mxu0 0.0
  %1734 = vmatpush1.msra.mxu0 0.0
  %1735 = vmatprep.subr.mxu0 0.0
  %1736 = vmatpush1.msra.mxu0 0.0
  %1737 = vmatprep.subr.mxu0 0.0
  %1738 = vmatpush1.msra.mxu0 0.0
  %1739 = vmatprep.subr.mxu0 0.0
  %1740 = vmatpush1.msra.mxu0 0.0
  %1741 = vmatprep.subr.mxu0 0.0
  %1742 = vmatpush1.msra.mxu0 0.0
  %1743 = vmatprep.subr.mxu0 0.0
  %1744 = vmatpush1.msra.mxu0 0.0
  %1745 = vmatprep.subr.mxu0 0.0
  %1746 = vmatpush1.msra.mxu0 0.0
  %1747 = vmatprep.subr.mxu0 0.0
  %1748 = vmatpush1.msra.mxu0 0.0
  %1749 = vmatprep.subr.mxu0 0.0
  %1750 = vmatpush1.msra.mxu0 0.0
  %1751 = vmatprep.mubr.f32.mxu0 0.0
  %1752 = vmatmul.mubr.f32.gmra.mrb[0].mxu0 %v1685
  %v1753 = vpop.f32.mrb[0].mxu0
  %v1754 = vadd.f32 0.0, %v1753
  %v1755 = vpop.f32.mrb[0].mxu0
  %1756 = vdwg.mxu0
  %1757 = vmatprep.subr.mxu0 0.0
  %1758 = vmatpush1.msra.mxu0 %v205
  %1759 = vmatprep.subr.mxu0 0.0
  %1760 = vmatpush1.msra.mxu0 %v206
  %1761 = vmatprep.subr.mxu0 0.0
  %1762 = vmatpush1.msra.mxu0 %v207
  %1763 = vmatprep.subr.mxu0 0.0
  %1764 = vmatpush1.msra.mxu0 %v208
  %1765 = vmatprep.subr.mxu0 0.0
  %1766 = vmatpush1.msra.mxu0 0.0
  %1767 = vmatprep.subr.mxu0 0.0
  %1768 = vmatpush1.msra.mxu0 0.0
  %1769 = vmatprep.subr.mxu0 0.0
  %1770 = vmatpush1.msra.mxu0 0.0
  %1771 = vmatprep.subr.mxu0 0.0
  %1772 = vmatpush1.msra.mxu0 0.0
  %1773 = vmatprep.subr.mxu0 0.0
  %1774 = vmatpush1.msra.mxu0 0.0
  %1775 = vmatprep.subr.mxu0 0.0
  %1776 = vmatpush1.msra.mxu0 0.0
  %1777 = vmatprep.subr.mxu0 0.0
  %1778 = vmatpush1.msra.mxu0 0.0
  %1779 = vmatprep.subr.mxu0 0.0
  %1780 = vmatpush1.msra.mxu0 0.0
  %1781 = vmatprep.subr.mxu0 0.0
  %1782 = vmatpush1.msra.mxu0 0.0
  %1783 = vmatprep.subr.mxu0 0.0
  %1784 = vmatpush1.msra.mxu0 0.0
  %1785 = vmatprep.subr.mxu0 0.0
  %1786 = vmatpush1.msra.mxu0 0.0
  %1787 = vmatprep.subr.mxu0 0.0
  %1788 = vmatpush1.msra.mxu0 0.0
  %1789 = vmatprep.subr.mxu0 0.0
  %1790 = vmatpush1.msra.mxu0 0.0
  %1791 = vmatprep.subr.mxu0 0.0
  %1792 = vmatpush1.msra.mxu0 0.0
  %1793 = vmatprep.subr.mxu0 0.0
  %1794 = vmatpush1.msra.mxu0 0.0
  %1795 = vmatprep.subr.mxu0 0.0
  %1796 = vmatpush1.msra.mxu0 0.0
  %1797 = vmatprep.subr.mxu0 0.0
  %1798 = vmatpush1.msra.mxu0 0.0
  %1799 = vmatprep.subr.mxu0 0.0
  %1800 = vmatpush1.msra.mxu0 0.0
  %1801 = vmatprep.subr.mxu0 0.0
  %1802 = vmatpush1.msra.mxu0 0.0
  %1803 = vmatprep.subr.mxu0 0.0
  %1804 = vmatpush1.msra.mxu0 0.0
  %1805 = vmatprep.subr.mxu0 0.0
  %1806 = vmatpush1.msra.mxu0 0.0
  %1807 = vmatprep.subr.mxu0 0.0
  %1808 = vmatpush1.msra.mxu0 0.0
  %1809 = vmatprep.subr.mxu0 0.0
  %1810 = vmatpush1.msra.mxu0 0.0
  %1811 = vmatprep.subr.mxu0 0.0
  %1812 = vmatpush1.msra.mxu0 0.0
  %1813 = vmatprep.subr.mxu0 0.0
  %1814 = vmatpush1.msra.mxu0 0.0
  %1815 = vmatprep.subr.mxu0 0.0
  %1816 = vmatpush1.msra.mxu0 0.0
  %1817 = vmatprep.subr.mxu0 0.0
  %1818 = vmatpush1.msra.mxu0 0.0
  %1819 = vmatprep.subr.mxu0 0.0
  %1820 = vmatpush1.msra.mxu0 0.0
  %1821 = vmatprep.mubr.f32.mxu0 0.0
  %1822 = vmatmul.mubr.f32.gmra.mrb[0].mxu0 %v1609
  %v1823 = vpop.f32.mrb[0].mxu0
  %v1824 = vadd.f32 %v1754, %v1823
  %v1825 = vpop.f32.mrb[0].mxu0
  %1826 = vdwg.mxu0
  %v1827 = vadd.f32 %v1824, %v218
  %v1828 = vxor.u32 %v1681, 2147483648
  %v1829 = vmul.f32 %v1828, 1.442695
  %v1830 = vpow.pop %v1829
  %v1831 = vadd.f32 %v1830, 1.0
  %v1832 = vrcp.pop %v1831
  %v1833 = vmul.f32 1.0, %v1832
  %v1834 = vtanh.pop %v1681
  %v1835 = vmul.f32 %v1833, %v1573
  %1837 = vrot.lane.b32.xlu0 %v1834, 32
  %v1838 = vpop.permute.xlu0 %1837
  %v1840 = vmul.f32 %v1833, %v1838
  %1842 = vrot.lane.b32.xlu0 %v1840, 32
  %v1843 = vpop.permute.xlu0 %1842
  %v1845 = vadd.f32 %v1835, %v1843
  %v1846 = vtanh.pop %v1845
  %1848 = vrot.lane.b32.xlu0 %v1846, 32
  %v1849 = vpop.permute.xlu0 %1848
  %v1851 = vmul.f32 %v1833, %v1849
  %v1852 = vxor.u32 %v1827, 2147483648
  %v1853 = vmul.f32 %v1852, 1.442695
  %v1854 = vpow.pop %v1853
  %v1855 = vadd.f32 %v1854, 1.0
  %v1856 = vrcp.pop %v1855
  %v1857 = vmul.f32 1.0, %v1856
  %v1858 = vtanh.pop %v1827
  %v1859 = vmul.f32 %v1857, %v1597
  %1861 = vrot.lane.b32.xlu0 %v1858, 32
  %v1862 = vpop.permute.xlu0 %1861
  %v1864 = vmul.f32 %v1857, %v1862
  %1866 = vrot.lane.b32.xlu0 %v1864, 32
  %v1867 = vpop.permute.xlu0 %1866
  %v1869 = vadd.f32 %v1859, %v1867
  %v1870 = vtanh.pop %v1869
  %1872 = vrot.lane.b32.xlu0 %v1870, 32
  %v1873 = vpop.permute.xlu0 %1872
  %v1875 = vmul.f32 %v1857, %v1873
  %s1876 = scalar_lea.vmem [#allocation2], 56
  %v1877 = vld [vmem:[%s1876] sm:$0xff]
  %1879 = vrot.lane.b32.xlu0 %v1851, 64
  %v1880 = vpop.permute.xlu0 %1879
  %v1881 = vsel %vm250, %v1880, 0
  %1883 = vmatprep.subr.mxu0 0.0
  %1884 = vmatpush1.msra.mxu0 %v201
  %1885 = vmatprep.subr.mxu0 0.0
  %1886 = vmatpush1.msra.mxu0 %v202
  %1887 = vmatprep.subr.mxu0 0.0
  %1888 = vmatpush1.msra.mxu0 %v203
  %1889 = vmatprep.subr.mxu0 0.0
  %1890 = vmatpush1.msra.mxu0 %v204
  %1891 = vmatprep.subr.mxu0 0.0
  %1892 = vmatpush1.msra.mxu0 0.0
  %1893 = vmatprep.subr.mxu0 0.0
  %1894 = vmatpush1.msra.mxu0 0.0
  %1895 = vmatprep.subr.mxu0 0.0
  %1896 = vmatpush1.msra.mxu0 0.0
  %1897 = vmatprep.subr.mxu0 0.0
  %1898 = vmatpush1.msra.mxu0 0.0
  %1899 = vmatprep.subr.mxu0 0.0
  %1900 = vmatpush1.msra.mxu0 0.0
  %1901 = vmatprep.subr.mxu0 0.0
  %1902 = vmatpush1.msra.mxu0 0.0
  %1903 = vmatprep.subr.mxu0 0.0
  %1904 = vmatpush1.msra.mxu0 0.0
  %1905 = vmatprep.subr.mxu0 0.0
  %1906 = vmatpush1.msra.mxu0 0.0
  %1907 = vmatprep.subr.mxu0 0.0
  %1908 = vmatpush1.msra.mxu0 0.0
  %1909 = vmatprep.subr.mxu0 0.0
  %1910 = vmatpush1.msra.mxu0 0.0
  %1911 = vmatprep.subr.mxu0 0.0
  %1912 = vmatpush1.msra.mxu0 0.0
  %1913 = vmatprep.subr.mxu0 0.0
  %1914 = vmatpush1.msra.mxu0 0.0
  %1915 = vmatprep.subr.mxu0 0.0
  %1916 = vmatpush1.msra.mxu0 0.0
  %1917 = vmatprep.subr.mxu0 0.0
  %1918 = vmatpush1.msra.mxu0 0.0
  %1919 = vmatprep.subr.mxu0 0.0
  %1920 = vmatpush1.msra.mxu0 0.0
  %1921 = vmatprep.subr.mxu0 0.0
  %1922 = vmatpush1.msra.mxu0 0.0
  %1923 = vmatprep.subr.mxu0 0.0
  %1924 = vmatpush1.msra.mxu0 0.0
  %1925 = vmatprep.subr.mxu0 0.0
  %1926 = vmatpush1.msra.mxu0 0.0
  %1927 = vmatprep.subr.mxu0 0.0
  %1928 = vmatpush1.msra.mxu0 0.0
  %1929 = vmatprep.subr.mxu0 0.0
  %1930 = vmatpush1.msra.mxu0 0.0
  %1931 = vmatprep.subr.mxu0 0.0
  %1932 = vmatpush1.msra.mxu0 0.0
  %1933 = vmatprep.subr.mxu0 0.0
  %1934 = vmatpush1.msra.mxu0 0.0
  %1935 = vmatprep.subr.mxu0 0.0
  %1936 = vmatpush1.msra.mxu0 0.0
  %1937 = vmatprep.subr.mxu0 0.0
  %1938 = vmatpush1.msra.mxu0 0.0
  %1939 = vmatprep.subr.mxu0 0.0
  %1940 = vmatpush1.msra.mxu0 0.0
  %1941 = vmatprep.subr.mxu0 0.0
  %1942 = vmatpush1.msra.mxu0 0.0
  %1943 = vmatprep.subr.mxu0 0.0
  %1944 = vmatpush1.msra.mxu0 0.0
  %1945 = vmatprep.subr.mxu0 0.0
  %1946 = vmatpush1.msra.mxu0 0.0
  %1947 = vmatprep.mubr.f32.mxu0 0.0
  %1948 = vmatmul.mubr.f32.gmra.mrb[0].mxu0 %v1881
  %v1949 = vpop.f32.mrb[0].mxu0
  %v1950 = vadd.f32 0.0, %v1949
  %v1951 = vpop.f32.mrb[0].mxu0
  %1952 = vdwg.mxu0
  %v1953 = vadd.f32 %v1877, %v1950
  %1955 = vrot.lane.b32.xlu0 %v1875, 64
  %v1956 = vpop.permute.xlu0 %1955
  %v1957 = vsel %vm250, %v1956, 0
  %1959 = vmatprep.subr.mxu0 0.0
  %1960 = vmatpush1.msra.mxu0 %v209
  %1961 = vmatprep.subr.mxu0 0.0
  %1962 = vmatpush1.msra.mxu0 %v210
  %1963 = vmatprep.subr.mxu0 0.0
  %1964 = vmatpush1.msra.mxu0 %v211
  %1965 = vmatprep.subr.mxu0 0.0
  %1966 = vmatpush1.msra.mxu0 %v212
  %1967 = vmatprep.subr.mxu0 0.0
  %1968 = vmatpush1.msra.mxu0 0.0
  %1969 = vmatprep.subr.mxu0 0.0
  %1970 = vmatpush1.msra.mxu0 0.0
  %1971 = vmatprep.subr.mxu0 0.0
  %1972 = vmatpush1.msra.mxu0 0.0
  %1973 = vmatprep.subr.mxu0 0.0
  %1974 = vmatpush1.msra.mxu0 0.0
  %1975 = vmatprep.subr.mxu0 0.0
  %1976 = vmatpush1.msra.mxu0 0.0
  %1977 = vmatprep.subr.mxu0 0.0
  %1978 = vmatpush1.msra.mxu0 0.0
  %1979 = vmatprep.subr.mxu0 0.0
  %1980 = vmatpush1.msra.mxu0 0.0
  %1981 = vmatprep.subr.mxu0 0.0
  %1982 = vmatpush1.msra.mxu0 0.0
  %1983 = vmatprep.subr.mxu0 0.0
  %1984 = vmatpush1.msra.mxu0 0.0
  %1985 = vmatprep.subr.mxu0 0.0
  %1986 = vmatpush1.msra.mxu0 0.0
  %1987 = vmatprep.subr.mxu0 0.0
  %1988 = vmatpush1.msra.mxu0 0.0
  %1989 = vmatprep.subr.mxu0 0.0
  %1990 = vmatpush1.msra.mxu0 0.0
  %1991 = vmatprep.subr.mxu0 0.0
  %1992 = vmatpush1.msra.mxu0 0.0
  %1993 = vmatprep.subr.mxu0 0.0
  %1994 = vmatpush1.msra.mxu0 0.0
  %1995 = vmatprep.subr.mxu0 0.0
  %1996 = vmatpush1.msra.mxu0 0.0
  %1997 = vmatprep.subr.mxu0 0.0
  %1998 = vmatpush1.msra.mxu0 0.0
  %1999 = vmatprep.subr.mxu0 0.0
  %2000 = vmatpush1.msra.mxu0 0.0
  %2001 = vmatprep.subr.mxu0 0.0
  %2002 = vmatpush1.msra.mxu0 0.0
  %2003 = vmatprep.subr.mxu0 0.0
  %2004 = vmatpush1.msra.mxu0 0.0
  %2005 = vmatprep.subr.mxu0 0.0
  %2006 = vmatpush1.msra.mxu0 0.0
  %2007 = vmatprep.subr.mxu0 0.0
  %2008 = vmatpush1.msra.mxu0 0.0
  %2009 = vmatprep.subr.mxu0 0.0
  %2010 = vmatpush1.msra.mxu0 0.0
  %2011 = vmatprep.subr.mxu0 0.0
  %2012 = vmatpush1.msra.mxu0 0.0
  %2013 = vmatprep.subr.mxu0 0.0
  %2014 = vmatpush1.msra.mxu0 0.0
  %2015 = vmatprep.subr.mxu0 0.0
  %2016 = vmatpush1.msra.mxu0 0.0
  %2017 = vmatprep.subr.mxu0 0.0
  %2018 = vmatpush1.msra.mxu0 0.0
  %2019 = vmatprep.subr.mxu0 0.0
  %2020 = vmatpush1.msra.mxu0 0.0
  %2021 = vmatprep.subr.mxu0 0.0
  %2022 = vmatpush1.msra.mxu0 0.0
  %2023 = vmatprep.mubr.f32.mxu0 0.0
  %2024 = vmatmul.mubr.f32.gmra.mrb[0].mxu0 %v1957
  %v2025 = vpop.f32.mrb[0].mxu0
  %v2026 = vadd.f32 0.0, %v2025
  %v2027 = vpop.f32.mrb[0].mxu0
  %2028 = vdwg.mxu0
  %2029 = vmatprep.subr.mxu0 0.0
  %2030 = vmatpush1.msra.mxu0 %v205
  %2031 = vmatprep.subr.mxu0 0.0
  %2032 = vmatpush1.msra.mxu0 %v206
  %2033 = vmatprep.subr.mxu0 0.0
  %2034 = vmatpush1.msra.mxu0 %v207
  %2035 = vmatprep.subr.mxu0 0.0
  %2036 = vmatpush1.msra.mxu0 %v208
  %2037 = vmatprep.subr.mxu0 0.0
  %2038 = vmatpush1.msra.mxu0 0.0
  %2039 = vmatprep.subr.mxu0 0.0
  %2040 = vmatpush1.msra.mxu0 0.0
  %2041 = vmatprep.subr.mxu0 0.0
  %2042 = vmatpush1.msra.mxu0 0.0
  %2043 = vmatprep.subr.mxu0 0.0
  %2044 = vmatpush1.msra.mxu0 0.0
  %2045 = vmatprep.subr.mxu0 0.0
  %2046 = vmatpush1.msra.mxu0 0.0
  %2047 = vmatprep.subr.mxu0 0.0
  %2048 = vmatpush1.msra.mxu0 0.0
  %2049 = vmatprep.subr.mxu0 0.0
  %2050 = vmatpush1.msra.mxu0 0.0
  %2051 = vmatprep.subr.mxu0 0.0
  %2052 = vmatpush1.msra.mxu0 0.0
  %2053 = vmatprep.subr.mxu0 0.0
  %2054 = vmatpush1.msra.mxu0 0.0
  %2055 = vmatprep.subr.mxu0 0.0
  %2056 = vmatpush1.msra.mxu0 0.0
  %2057 = vmatprep.subr.mxu0 0.0
  %2058 = vmatpush1.msra.mxu0 0.0
  %2059 = vmatprep.subr.mxu0 0.0
  %2060 = vmatpush1.msra.mxu0 0.0
  %2061 = vmatprep.subr.mxu0 0.0
  %2062 = vmatpush1.msra.mxu0 0.0
  %2063 = vmatprep.subr.mxu0 0.0
  %2064 = vmatpush1.msra.mxu0 0.0
  %2065 = vmatprep.subr.mxu0 0.0
  %2066 = vmatpush1.msra.mxu0 0.0
  %2067 = vmatprep.subr.mxu0 0.0
  %2068 = vmatpush1.msra.mxu0 0.0
  %2069 = vmatprep.subr.mxu0 0.0
  %2070 = vmatpush1.msra.mxu0 0.0
  %2071 = vmatprep.subr.mxu0 0.0
  %2072 = vmatpush1.msra.mxu0 0.0
  %2073 = vmatprep.subr.mxu0 0.0
  %2074 = vmatpush1.msra.mxu0 0.0
  %2075 = vmatprep.subr.mxu0 0.0
  %2076 = vmatpush1.msra.mxu0 0.0
  %2077 = vmatprep.subr.mxu0 0.0
  %2078 = vmatpush1.msra.mxu0 0.0
  %2079 = vmatprep.subr.mxu0 0.0
  %2080 = vmatpush1.msra.mxu0 0.0
  %2081 = vmatprep.subr.mxu0 0.0
  %2082 = vmatpush1.msra.mxu0 0.0
  %2083 = vmatprep.subr.mxu0 0.0
  %2084 = vmatpush1.msra.mxu0 0.0
  %2085 = vmatprep.subr.mxu0 0.0
  %2086 = vmatpush1.msra.mxu0 0.0
  %2087 = vmatprep.subr.mxu0 0.0
  %2088 = vmatpush1.msra.mxu0 0.0
  %2089 = vmatprep.subr.mxu0 0.0
  %2090 = vmatpush1.msra.mxu0 0.0
  %2091 = vmatprep.subr.mxu0 0.0
  %2092 = vmatpush1.msra.mxu0 0.0
  %2093 = vmatprep.mubr.f32.mxu0 0.0
  %2094 = vmatmul.mubr.f32.gmra.mrb[0].mxu0 %v1881
  %v2095 = vpop.f32.mrb[0].mxu0
  %v2096 = vadd.f32 %v2026, %v2095
  %v2097 = vpop.f32.mrb[0].mxu0
  %2098 = vdwg.mxu0
  %v2099 = vadd.f32 %v2096, %v218
  %v2100 = vxor.u32 %v1953, 2147483648
  %v2101 = vmul.f32 %v2100, 1.442695
  %v2102 = vpow.pop %v2101
  %v2103 = vadd.f32 %v2102, 1.0
  %v2104 = vrcp.pop %v2103
  %v2105 = vmul.f32 1.0, %v2104
  %v2106 = vtanh.pop %v1953
  %v2107 = vmul.f32 %v2105, %v1845
  %2109 = vrot.lane.b32.xlu0 %v2106, 32
  %v2110 = vpop.permute.xlu0 %2109
  %v2112 = vmul.f32 %v2105, %v2110
  %2114 = vrot.lane.b32.xlu0 %v2112, 32
  %v2115 = vpop.permute.xlu0 %2114
  %v2117 = vadd.f32 %v2107, %v2115
  %v2118 = vtanh.pop %v2117
  %2120 = vrot.lane.b32.xlu0 %v2118, 32
  %v2121 = vpop.permute.xlu0 %2120
  %v2123 = vmul.f32 %v2105, %v2121
  %v2124 = vxor.u32 %v2099, 2147483648
  %v2125 = vmul.f32 %v2124, 1.442695
  %v2126 = vpow.pop %v2125
  %v2127 = vadd.f32 %v2126, 1.0
  %v2128 = vrcp.pop %v2127
  %v2129 = vmul.f32 1.0, %v2128
  %v2130 = vtanh.pop %v2099
  %v2131 = vmul.f32 %v2129, %v1869
  %2133 = vrot.lane.b32.xlu0 %v2130, 32
  %v2134 = vpop.permute.xlu0 %2133
  %v2136 = vmul.f32 %v2129, %v2134
  %2138 = vrot.lane.b32.xlu0 %v2136, 32
  %v2139 = vpop.permute.xlu0 %2138
  %v2141 = vadd.f32 %v2131, %v2139
  %v2142 = vtanh.pop %v2141
  %2144 = vrot.lane.b32.xlu0 %v2142, 32
  %v2145 = vpop.permute.xlu0 %2144
  %v2147 = vmul.f32 %v2129, %v2145
  %2149 = vrot.lane.b32.xlu0 %v2147, 64
  %v2150 = vpop.permute.xlu0 %2149
  %v2151 = vsel %vm250, %v2150, 0
  %2153 = vmatprep.subr.mxu0 0.0
  %2154 = vmatpush1.msra.mxu0 %v209
  %2155 = vmatprep.subr.mxu0 0.0
  %2156 = vmatpush1.msra.mxu0 %v210
  %2157 = vmatprep.subr.mxu0 0.0
  %2158 = vmatpush1.msra.mxu0 %v211
  %2159 = vmatprep.subr.mxu0 0.0
  %2160 = vmatpush1.msra.mxu0 %v212
  %2161 = vmatprep.subr.mxu0 0.0
  %2162 = vmatpush1.msra.mxu0 0.0
  %2163 = vmatprep.subr.mxu0 0.0
  %2164 = vmatpush1.msra.mxu0 0.0
  %2165 = vmatprep.subr.mxu0 0.0
  %2166 = vmatpush1.msra.mxu0 0.0
  %2167 = vmatprep.subr.mxu0 0.0
  %2168 = vmatpush1.msra.mxu0 0.0
  %2169 = vmatprep.subr.mxu0 0.0
  %2170 = vmatpush1.msra.mxu0 0.0
  %2171 = vmatprep.subr.mxu0 0.0
  %2172 = vmatpush1.msra.mxu0 0.0
  %2173 = vmatprep.subr.mxu0 0.0
  %2174 = vmatpush1.msra.mxu0 0.0
  %2175 = vmatprep.subr.mxu0 0.0
  %2176 = vmatpush1.msra.mxu0 0.0
  %2177 = vmatprep.subr.mxu0 0.0
  %2178 = vmatpush1.msra.mxu0 0.0
  %2179 = vmatprep.subr.mxu0 0.0
  %2180 = vmatpush1.msra.mxu0 0.0
  %2181 = vmatprep.subr.mxu0 0.0
  %2182 = vmatpush1.msra.mxu0 0.0
  %2183 = vmatprep.subr.mxu0 0.0
  %2184 = vmatpush1.msra.mxu0 0.0
  %2185 = vmatprep.subr.mxu0 0.0
  %2186 = vmatpush1.msra.mxu0 0.0
  %2187 = vmatprep.subr.mxu0 0.0
  %2188 = vmatpush1.msra.mxu0 0.0
  %2189 = vmatprep.subr.mxu0 0.0
  %2190 = vmatpush1.msra.mxu0 0.0
  %2191 = vmatprep.subr.mxu0 0.0
  %2192 = vmatpush1.msra.mxu0 0.0
  %2193 = vmatprep.subr.mxu0 0.0
  %2194 = vmatpush1.msra.mxu0 0.0
  %2195 = vmatprep.subr.mxu0 0.0
  %2196 = vmatpush1.msra.mxu0 0.0
  %2197 = vmatprep.subr.mxu0 0.0
  %2198 = vmatpush1.msra.mxu0 0.0
  %2199 = vmatprep.subr.mxu0 0.0
  %2200 = vmatpush1.msra.mxu0 0.0
  %2201 = vmatprep.subr.mxu0 0.0
  %2202 = vmatpush1.msra.mxu0 0.0
  %2203 = vmatprep.subr.mxu0 0.0
  %2204 = vmatpush1.msra.mxu0 0.0
  %2205 = vmatprep.subr.mxu0 0.0
  %2206 = vmatpush1.msra.mxu0 0.0
  %2207 = vmatprep.subr.mxu0 0.0
  %2208 = vmatpush1.msra.mxu0 0.0
  %2209 = vmatprep.subr.mxu0 0.0
  %2210 = vmatpush1.msra.mxu0 0.0
  %2211 = vmatprep.subr.mxu0 0.0
  %2212 = vmatpush1.msra.mxu0 0.0
  %2213 = vmatprep.subr.mxu0 0.0
  %2214 = vmatpush1.msra.mxu0 0.0
  %2215 = vmatprep.subr.mxu0 0.0
  %2216 = vmatpush1.msra.mxu0 0.0
  %2217 = vmatprep.mubr.f32.mxu0 0.0
  %2218 = vmatmul.mubr.f32.gmra.mrb[0].mxu0 %v2151
  %v2219 = vpop.f32.mrb[0].mxu0
  %v2220 = vadd.f32 0.0, %v2219
  %v2221 = vpop.f32.mrb[0].mxu0
  %2222 = vdwg.mxu0
  %2224 = vrot.lane.b32.xlu0 %v2123, 64
  %v2225 = vpop.permute.xlu0 %2224
  %v2226 = vsel %vm250, %v2225, 0
  %2228 = vmatprep.subr.mxu0 0.0
  %2229 = vmatpush1.msra.mxu0 %v205
  %2230 = vmatprep.subr.mxu0 0.0
  %2231 = vmatpush1.msra.mxu0 %v206
  %2232 = vmatprep.subr.mxu0 0.0
  %2233 = vmatpush1.msra.mxu0 %v207
  %2234 = vmatprep.subr.mxu0 0.0
  %2235 = vmatpush1.msra.mxu0 %v208
  %2236 = vmatprep.subr.mxu0 0.0
  %2237 = vmatpush1.msra.mxu0 0.0
  %2238 = vmatprep.subr.mxu0 0.0
  %2239 = vmatpush1.msra.mxu0 0.0
  %2240 = vmatprep.subr.mxu0 0.0
  %2241 = vmatpush1.msra.mxu0 0.0
  %2242 = vmatprep.subr.mxu0 0.0
  %2243 = vmatpush1.msra.mxu0 0.0
  %2244 = vmatprep.subr.mxu0 0.0
  %2245 = vmatpush1.msra.mxu0 0.0
  %2246 = vmatprep.subr.mxu0 0.0
  %2247 = vmatpush1.msra.mxu0 0.0
  %2248 = vmatprep.subr.mxu0 0.0
  %2249 = vmatpush1.msra.mxu0 0.0
  %2250 = vmatprep.subr.mxu0 0.0
  %2251 = vmatpush1.msra.mxu0 0.0
  %2252 = vmatprep.subr.mxu0 0.0
  %2253 = vmatpush1.msra.mxu0 0.0
  %2254 = vmatprep.subr.mxu0 0.0
  %2255 = vmatpush1.msra.mxu0 0.0
  %2256 = vmatprep.subr.mxu0 0.0
  %2257 = vmatpush1.msra.mxu0 0.0
  %2258 = vmatprep.subr.mxu0 0.0
  %2259 = vmatpush1.msra.mxu0 0.0
  %2260 = vmatprep.subr.mxu0 0.0
  %2261 = vmatpush1.msra.mxu0 0.0
  %2262 = vmatprep.subr.mxu0 0.0
  %2263 = vmatpush1.msra.mxu0 0.0
  %2264 = vmatprep.subr.mxu0 0.0
  %2265 = vmatpush1.msra.mxu0 0.0
  %2266 = vmatprep.subr.mxu0 0.0
  %2267 = vmatpush1.msra.mxu0 0.0
  %2268 = vmatprep.subr.mxu0 0.0
  %2269 = vmatpush1.msra.mxu0 0.0
  %2270 = vmatprep.subr.mxu0 0.0
  %2271 = vmatpush1.msra.mxu0 0.0
  %2272 = vmatprep.subr.mxu0 0.0
  %2273 = vmatpush1.msra.mxu0 0.0
  %2274 = vmatprep.subr.mxu0 0.0
  %2275 = vmatpush1.msra.mxu0 0.0
  %2276 = vmatprep.subr.mxu0 0.0
  %2277 = vmatpush1.msra.mxu0 0.0
  %2278 = vmatprep.subr.mxu0 0.0
  %2279 = vmatpush1.msra.mxu0 0.0
  %2280 = vmatprep.subr.mxu0 0.0
  %2281 = vmatpush1.msra.mxu0 0.0
  %2282 = vmatprep.subr.mxu0 0.0
  %2283 = vmatpush1.msra.mxu0 0.0
  %2284 = vmatprep.subr.mxu0 0.0
  %2285 = vmatpush1.msra.mxu0 0.0
  %2286 = vmatprep.subr.mxu0 0.0
  %2287 = vmatpush1.msra.mxu0 0.0
  %2288 = vmatprep.subr.mxu0 0.0
  %2289 = vmatpush1.msra.mxu0 0.0
  %2290 = vmatprep.subr.mxu0 0.0
  %2291 = vmatpush1.msra.mxu0 0.0
  %2292 = vmatprep.mubr.f32.mxu0 0.0
  %2293 = vmatmul.mubr.f32.gmra.mrb[0].mxu0 %v2226
  %v2294 = vpop.f32.mrb[0].mxu0
  %v2295 = vadd.f32 %v2220, %v2294
  %v2296 = vpop.f32.mrb[0].mxu0
  %2297 = vdwg.mxu0
  %v2298 = vadd.f32 %v2295, %v218
  %v2299 = vxor.u32 %v2298, 2147483648
  %v2300 = vmul.f32 %v2299, 1.442695
  %v2301 = vpow.pop %v2300
  %v2302 = vadd.f32 %v2301, 1.0
  %v2303 = vrcp.pop %v2302
  %v2304 = vmul.f32 1.0, %v2303
  %v2305 = vtanh.pop %v2298
  %v2306 = vmul.f32 %v2304, %v2141
  %2308 = vrot.lane.b32.xlu0 %v2305, 32
  %v2309 = vpop.permute.xlu0 %2308
  %v2311 = vmul.f32 %v2304, %v2309
  %2313 = vrot.lane.b32.xlu0 %v2311, 32
  %v2314 = vpop.permute.xlu0 %2313
  %v2316 = vadd.f32 %v2306, %v2314
  %v2317 = vtanh.pop %v2316
  %2319 = vrot.lane.b32.xlu0 %v2317, 32
  %v2320 = vpop.permute.xlu0 %2319
  %v2322 = vmul.f32 %v2304, %v2320
  %v2323 = vld [vmem:[%s7] sm:$0x1]
  %v2325 = vlaneseq
  %v2326 = vshrl.u32 %v2325, 7
  %v2327 = vsub.s32 0, %v2326
  %v2328 = vrot.slane %v2323, %v2327
  %2329 = vrot.lane.b32.xlu0 %v2328, 64
  %v2330 = vpop.permute.xlu0 %2329
  %v2332 = vmul.f32 %v2322, %v2330
  %v2333 = vld [vmem:[%s8] sm:$0x1]
  %v2335 = vlaneseq
  %v2336 = vshrl.u32 %v2335, 7
  %v2337 = vsub.s32 0, %v2336
  %v2338 = vrot.slane %v2333, %v2337
  %2339 = vrot.lane.b32.xlu0 %v2338, 64
  %v2340 = vpop.permute.xlu0 %2339
  %v2342 = vadd.f32 %v2332, %v2340
  %v2343 = vld [vmem:[%s9] sm:$0xff]
  %v2344 = vld [vmem:[%s9 + $0x8] sm:$0xff]
  %v2345 = vld [vmem:[%s9 + $0x10] sm:$0xff]
  %v2346 = vld [vmem:[%s9 + $0x18] sm:$0xff]
  %v2347 = vld [vmem:[%s10] sm:$0x1]
  %v2349 = vlaneseq
  %v2350 = vshrl.u32 %v2349, 7
  %v2351 = vsub.s32 0, %v2350
  %v2352 = vrot.slane %v2347, %v2351
  %2355 = vrot.lane.b32.xlu0 %v2342, 64
  %v2356 = vpop.permute.xlu0 %2355
  %v2357 = vsel %vm250, %v2356, 0
  %2359 = vmatprep.subr.mxu0 0.0
  %2360 = vmatpush1.msra.mxu0 %v2343
  %2361 = vmatprep.subr.mxu0 0.0
  %2362 = vmatpush1.msra.mxu0 %v2344
  %2363 = vmatprep.subr.mxu0 0.0
  %2364 = vmatpush1.msra.mxu0 %v2345
  %2365 = vmatprep.subr.mxu0 0.0
  %2366 = vmatpush1.msra.mxu0 %v2346
  %2367 = vmatprep.subr.mxu0 0.0
  %2368 = vmatpush1.msra.mxu0 0.0
  %2369 = vmatprep.subr.mxu0 0.0
  %2370 = vmatpush1.msra.mxu0 0.0
  %2371 = vmatprep.subr.mxu0 0.0
  %2372 = vmatpush1.msra.mxu0 0.0
  %2373 = vmatprep.subr.mxu0 0.0
  %2374 = vmatpush1.msra.mxu0 0.0
  %2375 = vmatprep.subr.mxu0 0.0
  %2376 = vmatpush1.msra.mxu0 0.0
  %2377 = vmatprep.subr.mxu0 0.0
  %2378 = vmatpush1.msra.mxu0 0.0
  %2379 = vmatprep.subr.mxu0 0.0
  %2380 = vmatpush1.msra.mxu0 0.0
  %2381 = vmatprep.subr.mxu0 0.0
  %2382 = vmatpush1.msra.mxu0 0.0
  %2383 = vmatprep.subr.mxu0 0.0
  %2384 = vmatpush1.msra.mxu0 0.0
  %2385 = vmatprep.subr.mxu0 0.0
  %2386 = vmatpush1.msra.mxu0 0.0
  %2387 = vmatprep.subr.mxu0 0.0
  %2388 = vmatpush1.msra.mxu0 0.0
  %2389 = vmatprep.subr.mxu0 0.0
  %2390 = vmatpush1.msra.mxu0 0.0
  %2391 = vmatprep.subr.mxu0 0.0
  %2392 = vmatpush1.msra.mxu0 0.0
  %2393 = vmatprep.subr.mxu0 0.0
  %2394 = vmatpush1.msra.mxu0 0.0
  %2395 = vmatprep.subr.mxu0 0.0
  %2396 = vmatpush1.msra.mxu0 0.0
  %2397 = vmatprep.subr.mxu0 0.0
  %2398 = vmatpush1.msra.mxu0 0.0
  %2399 = vmatprep.subr.mxu0 0.0
  %2400 = vmatpush1.msra.mxu0 0.0
  %2401 = vmatprep.subr.mxu0 0.0
  %2402 = vmatpush1.msra.mxu0 0.0
  %2403 = vmatprep.subr.mxu0 0.0
  %2404 = vmatpush1.msra.mxu0 0.0
  %2405 = vmatprep.subr.mxu0 0.0
  %2406 = vmatpush1.msra.mxu0 0.0
  %2407 = vmatprep.subr.mxu0 0.0
  %2408 = vmatpush1.msra.mxu0 0.0
  %2409 = vmatprep.subr.mxu0 0.0
  %2410 = vmatpush1.msra.mxu0 0.0
  %2411 = vmatprep.subr.mxu0 0.0
  %2412 = vmatpush1.msra.mxu0 0.0
  %2413 = vmatprep.subr.mxu0 0.0
  %2414 = vmatpush1.msra.mxu0 0.0
  %2415 = vmatprep.subr.mxu0 0.0
  %2416 = vmatpush1.msra.mxu0 0.0
  %2417 = vmatprep.subr.mxu0 0.0
  %2418 = vmatpush1.msra.mxu0 0.0
  %2419 = vmatprep.subr.mxu0 0.0
  %2420 = vmatpush1.msra.mxu0 0.0
  %2421 = vmatprep.subr.mxu0 0.0
  %2422 = vmatpush1.msra.mxu0 0.0
  %2423 = vmatprep.mubr.f32.mxu0 0.0
  %2424 = vmatmul.mubr.f32.gmra.mrb[0].mxu0 %v2357
  %v2425 = vpop.f32.mrb[0].mxu0
  %v2426 = vadd.f32 %v2352, %v2425
  %v2427 = vpop.f32.mrb[0].mxu0
  %2428 = vdwg.mxu0
  %v2429 = vmax.f32 %v2426, 0.0
  %v2430 = vld [vmem:[%s11] sm:$0x1]
  %v2432 = vlaneseq
  %v2433 = vshrl.u32 %v2432, 7
  %v2434 = vsub.s32 0, %v2433
  %v2435 = vrot.slane %v2430, %v2434
  %v2437 = vmul.f32 %v2429, %v2435
  %v2438 = vsel %vm63, %v2437, 0.0
  %2439 = vadd.xlane.f32.xlu0 %v2438
  %v2440 = vpop.xlane.xlu0 %2439
  %v2441 = vld [vmem:[#allocation3] sm:$0x1]
  %v2443 = vlaneseq
  %v2444 = vshrl.u32 %v2443, 7
  %v2445 = vsub.s32 0, %v2444
  %v2446 = vrot.slane %v2441, %v2445
  %v2448 = vadd.f32 %v2440, %v2446
  %v2449 = vxor.u32 %v2448, 2147483648
  %v2450 = vmul.f32 %v2449, 1.442695
  %v2451 = vpow.pop %v2450
  %v2452 = vadd.f32 %v2451, 1.0
  %v2453 = vrcp.pop %v2452
  %v2454 = vmul.f32 1.0, %v2453
  %vm2455 = vcmask 7168
  %2456 = vst.msk [vmem:[%s13] sm:$0xff] %vm2455, %v2454
  // Predicated region
  $region54: #{lstm_binary_classifier.1} parent=0 // pred_check
    _
  $region55: #{lstm_binary_classifier.1} parent=0 // pred_check_branch
    %2458 = sbr.rel (0) target = $region57
  $region56: #{lstm_binary_classifier.1} parent=0 // pred_region
    _
  $region57: #{lstm_binary_classifier.1} parent=0 // pred_fallthru
    _
  // Predicated region
  $region58: #{lstm_binary_classifier.1} parent=0 // pred_check
    _
  $region59: #{lstm_binary_classifier.1} parent=0 // pred_check_branch
    %2460 = sbr.rel (0) target = $region61
  $region60: #{lstm_binary_classifier.1} parent=0 // pred_region
    _
  $region61: #{lstm_binary_classifier.1} parent=0 // pred_fallthru
    _

</llo_original>
